<compile_context>
chip_gen: v7x
topology: tpu7x:2x2x1
jax: 0.10.0
libtpu: 0.0.40
codegen_flags: <defaults>
</compile_context>

<pallas_src>
import functools

import jax
import jax.numpy as jnp
from jax.experimental import pallas as pl
from jax.experimental.pallas import tpu as pltpu


def _chain_loss_kernel(x_ref, w_ref, b_ref, tgt_ref,
                       seqebm_ref, xent_ref, correct_ref, l2_ref,
                       *, num_pdfs, tile_m, tiles_per_core, num_valid):
    c = pl.program_id(0)          # shard / core axis  ("parallel")
    i = pl.program_id(1)          # frame-tile axis    ("arbitrary", reduction)

    @pl.when(i == 0)
    def _init():
        seqebm_ref[...] = jnp.zeros_like(seqebm_ref)
        xent_ref[...] = jnp.zeros_like(xent_ref)
        correct_ref[...] = jnp.zeros_like(correct_ref)
        l2_ref[...] = jnp.zeros_like(l2_ref)

    # Fused two-head matmul on the MXU: bf16 inputs, f32 accumulation.
    y = jnp.dot(x_ref[...], w_ref[...],
                preferred_element_type=jnp.float32) + b_ref[...]        # (TM, 2C) f32
    chain = y[:, :num_pdfs]                                             # chain head
    xent = y[:, num_pdfs:]                                              # xent head

    # Row-validity mask for the zero-padded tail of the frame axis.
    row0 = (c * tiles_per_core + i) * tile_m
    rows = row0 + jax.lax.broadcasted_iota(jnp.int32, (tile_m, 1), 0)
    valid = rows < num_valid                                            # (TM, 1) bool

    # --- SeqEBM free-energy surrogate: -sum_t logsumexp_c(chain[t, c]) ---
    m_c = jnp.max(chain, axis=-1, keepdims=True)
    lse_c = m_c + jnp.log(jnp.sum(jnp.exp(chain - m_c), axis=-1, keepdims=True))
    lse_c = jnp.where(valid, lse_c, 0.0)
    seqebm_ref[...] += -jnp.sum(lse_c, axis=(0, 1), keepdims=True).reshape(1, 1, 1)

    # --- Cross entropy (summed NLL; the mean over frames is taken in the wrapper) ---
    m_x = jnp.max(xent, axis=-1, keepdims=True)
    lse_x = m_x + jnp.log(jnp.sum(jnp.exp(xent - m_x), axis=-1, keepdims=True))
    tgt = tgt_ref[...]                                                  # (TM, 1) int32
    col = jax.lax.broadcasted_iota(jnp.int32, (tile_m, num_pdfs), 1)
    # masked select-and-reduce (no explicit one-hot f32 temporary)
    tgt_logit = jnp.sum(jnp.where(col == tgt, xent, 0.0),
                        axis=-1, keepdims=True)                         # (TM, 1)
    nll = jnp.where(valid, lse_x - tgt_logit, 0.0)
    xent_ref[...] += jnp.sum(nll, axis=(0, 1), keepdims=True).reshape(1, 1, 1)

    # correct count: target logit attains the row max (ties measure-zero for float logits)
    correct_row = jnp.where(valid & (tgt_logit >= m_x), 1.0, 0.0)
    correct_ref[...] += jnp.sum(correct_row, axis=(0, 1), keepdims=True).reshape(1, 1, 1)

    # --- L2 regularizer on the chain output ---
    sumsq_row = jnp.where(valid, jnp.sum(chain * chain, axis=-1, keepdims=True), 0.0)
    l2_ref[...] += jnp.sum(sumsq_row, axis=(0, 1), keepdims=True).reshape(1, 1, 1)


def chain_loss(x, wc, bc, wx, bx, targets, *, xent_reg=0.2, l2_reg=0.00025,
               tile_m=256, num_shards=2):
    """x: (B, T, D) features; targets: (B, T) int (-1 in [0,0] marks an unsupervised batch)."""
    B, T, D = x.shape
    C = wc.shape[1]
    N = B * T

    # Fuse the two linear heads into a single (D, 2C) bf16 weight -> one MXU pass.
    w_fused = jnp.concatenate([wc, wx], axis=1).astype(jnp.bfloat16)
    b_fused = jnp.concatenate([bc, bx]).reshape(1, 2 * C).astype(jnp.float32)

    # bf16 frame stream halves HBM traffic; the matmul accumulates in f32.
    xf = x.reshape(N, D).astype(jnp.bfloat16)
    tf = targets.reshape(N, 1).astype(jnp.int32)

    # Pad the frame axis so it splits evenly into num_shards * tiles_per_core tiles.
    n_tiles = -(-N // tile_m)
    n_tiles = -(-n_tiles // num_shards) * num_shards
    tiles_per_core = n_tiles // num_shards
    n_pad = n_tiles * tile_m
    xf = jnp.pad(xf, ((0, n_pad - N), (0, 0)))
    tf = jnp.pad(tf, ((0, n_pad - N), (0, 0)))

    kernel = functools.partial(_chain_loss_kernel, num_pdfs=C, tile_m=tile_m,
                               tiles_per_core=tiles_per_core, num_valid=N)

    out_shapes = tuple(jax.ShapeDtypeStruct((num_shards, 1, 1), jnp.float32)
                       for _ in range(4))
    scalar_spec = pl.BlockSpec((1, 1, 1), lambda c, i: (c, 0, 0))   # per-shard accumulator

    grid_spec = pltpu.PrefetchScalarGridSpec(
        num_scalar_prefetch=0,
        grid=(num_shards, tiles_per_core),
        in_specs=[
            pl.BlockSpec((tile_m, D), lambda c, i: (c * tiles_per_core + i, 0)),  # streamed x
            pl.BlockSpec((D, 2 * C), lambda c, i: (0, 0)),                        # resident weights
            pl.BlockSpec((1, 2 * C), lambda c, i: (0, 0)),                        # resident bias
            pl.BlockSpec((tile_m, 1), lambda c, i: (c * tiles_per_core + i, 0)),  # streamed targets
        ],
        out_specs=(scalar_spec,) * 4,
    )

    cost = pl.CostEstimate(
        flops=2 * n_pad * D * 2 * C,
        transcendentals=2 * n_pad * C,
        bytes_accessed=(xf.size * 2 + w_fused.size * 2 + b_fused.size * 4
                        + tf.size * 4 + 4 * num_shards * 4),
    )

    seqebm, xent_sum, correct_f, sumsq = pl.pallas_call(
        kernel,
        out_shape=out_shapes,
        grid_spec=grid_spec,
        compiler_params=pltpu.CompilerParams(
            dimension_semantics=("parallel", "arbitrary"),
            vmem_limit_bytes=48 * 1024 * 1024,
        ),
        cost_estimate=cost,
    )(xf, w_fused, b_fused, tf)

    seqebm_loss = jnp.sum(seqebm) / B                     # per-sequence free energy
    xent_loss = xent_reg * (jnp.sum(xent_sum) / N)        # F.cross_entropy reduction='mean'
    l2_loss = l2_reg * 0.5 * jnp.sum(sumsq)

    is_sup = (targets.reshape(-1)[0] != -1).astype(jnp.float32)
    loss = seqebm_loss + is_sup * (xent_loss + l2_loss)
    correct = (is_sup * jnp.sum(correct_f)).astype(jnp.int32)
    return loss, correct


if __name__ == "__main__":
    key = jax.random.PRNGKey(0)
    B, T, D, C = 2, 8, 32, 32      # batch, frames, feature dim, num pdfs
    k1, k2, k3, k4, k5, k6 = jax.random.split(key, 6)

    x = jax.random.normal(k1, (B, T, D), jnp.float32)
    # deterministic synthetic "model" parameters (two linear heads: chain + xent)
    wc = 0.1 * jax.random.normal(k2, (D, C), jnp.float32)
    bc = 0.01 * jax.random.normal(k5, (C,), jnp.float32)
    wx = 0.1 * jax.random.normal(k3, (D, C), jnp.float32)
    bx = 0.01 * jax.random.normal(k6, (C,), jnp.float32)
    targets = jax.random.randint(k4, (B, T), 0, C, jnp.int32)  # supervised batch

    loss, correct = chain_loss(x, wc, bc, wx, bx, targets)
    jax.block_until_ready((loss, correct))
    print("KERNEL_OK")
</pallas_src>

<mosaic_0001>
module attributes {stable_mosaic.version = 11 : i64} {
  func.func @_chain_loss_kernel(%arg0: i32, %arg1: i32, %arg2: memref<256x32xbf16, #tpu.memory_space<vmem>>, %arg3: memref<32x64xbf16, #tpu.memory_space<vmem>>, %arg4: memref<1x64xf32, #tpu.memory_space<vmem>>, %arg5: memref<256x1xi32, #tpu.memory_space<vmem>>, %arg6: memref<1x1x1xf32, #tpu.memory_space<vmem>>, %arg7: memref<1x1x1xf32, #tpu.memory_space<vmem>>, %arg8: memref<1x1x1xf32, #tpu.memory_space<vmem>>, %arg9: memref<1x1x1xf32, #tpu.memory_space<vmem>>) attributes {dimension_semantics = [#tpu.dimension_semantics<parallel>, #tpu.dimension_semantics<arbitrary>], iteration_bounds = array<i64: 2, 1>, scalar_prefetch = 0 : i64, scratch_operands = 0 : i64, tpu.core_type = #tpu.core_type<tc>, window_params = [{transform_indices = @transform_0, window_bounds = array<i64: 256, 32>}, {pipeline_mode = #tpu.pipeline_mode<synchronous>, transform_indices = @transform_1, window_bounds = array<i64: 32, 64>}, {pipeline_mode = #tpu.pipeline_mode<synchronous>, transform_indices = @transform_2, window_bounds = array<i64: 1, 64>}, {transform_indices = @transform_3, window_bounds = array<i64: 256, 1>}, {transform_indices = @transform_4, window_bounds = array<i64: 1, 1, 1>}, {transform_indices = @transform_5, window_bounds = array<i64: 1, 1, 1>}, {transform_indices = @transform_6, window_bounds = array<i64: 1, 1, 1>}, {transform_indices = @transform_7, window_bounds = array<i64: 1, 1, 1>}]} {
    %c0_i32 = arith.constant 0 : i32
    %0 = arith.cmpi eq, %arg1, %c0_i32 : i32
    %1 = arith.extui %0 : i1 to i32
    %c0_i32_0 = arith.constant 0 : i32
    %2 = arith.cmpi ne, %1, %c0_i32_0 : i32
    scf.if %2 {
      %cst_49 = arith.constant 0.000000e+00 : f32
      %98 = vector.broadcast %cst_49 : f32 to vector<1x1x1xf32>
      %c0_50 = arith.constant 0 : index
      %c0_51 = arith.constant 0 : index
      %c0_52 = arith.constant 0 : index
      %99 = vector.load %arg6[%c0_50, %c0_51, %c0_52] : memref<1x1x1xf32, #tpu.memory_space<vmem>>, vector<1x1x1xf32>
      tpu.vector_store %arg6[%c0_50, %c0_51, %c0_52], %98 {strides = array<i32>} : memref<1x1x1xf32, #tpu.memory_space<vmem>>, vector<1x1x1xf32>,
      %cst_53 = arith.constant 0.000000e+00 : f32
      %100 = vector.broadcast %cst_53 : f32 to vector<1x1x1xf32>
      %c0_54 = arith.constant 0 : index
      %c0_55 = arith.constant 0 : index
      %c0_56 = arith.constant 0 : index
      %101 = vector.load %arg7[%c0_54, %c0_55, %c0_56] : memref<1x1x1xf32, #tpu.memory_space<vmem>>, vector<1x1x1xf32>
      tpu.vector_store %arg7[%c0_54, %c0_55, %c0_56], %100 {strides = array<i32>} : memref<1x1x1xf32, #tpu.memory_space<vmem>>, vector<1x1x1xf32>,
      %cst_57 = arith.constant 0.000000e+00 : f32
      %102 = vector.broadcast %cst_57 : f32 to vector<1x1x1xf32>
      %c0_58 = arith.constant 0 : index
      %c0_59 = arith.constant 0 : index
      %c0_60 = arith.constant 0 : index
      %103 = vector.load %arg8[%c0_58, %c0_59, %c0_60] : memref<1x1x1xf32, #tpu.memory_space<vmem>>, vector<1x1x1xf32>
      tpu.vector_store %arg8[%c0_58, %c0_59, %c0_60], %102 {strides = array<i32>} : memref<1x1x1xf32, #tpu.memory_space<vmem>>, vector<1x1x1xf32>,
      %cst_61 = arith.constant 0.000000e+00 : f32
      %104 = vector.broadcast %cst_61 : f32 to vector<1x1x1xf32>
      %c0_62 = arith.constant 0 : index
      %c0_63 = arith.constant 0 : index
      %c0_64 = arith.constant 0 : index
      %105 = vector.load %arg9[%c0_62, %c0_63, %c0_64] : memref<1x1x1xf32, #tpu.memory_space<vmem>>, vector<1x1x1xf32>
      tpu.vector_store %arg9[%c0_62, %c0_63, %c0_64], %104 {strides = array<i32>} : memref<1x1x1xf32, #tpu.memory_space<vmem>>, vector<1x1x1xf32>,
    } else {
    }
    %c0 = arith.constant 0 : index
    %c0_1 = arith.constant 0 : index
    %3 = vector.load %arg2[%c0, %c0_1] : memref<256x32xbf16, #tpu.memory_space<vmem>>, vector<256x32xbf16>
    %c0_2 = arith.constant 0 : index
    %c0_3 = arith.constant 0 : index
    %4 = vector.load %arg3[%c0_2, %c0_3] : memref<32x64xbf16, #tpu.memory_space<vmem>>, vector<32x64xbf16>
    %cst = arith.constant dense<0.000000e+00> : vector<256x64xf32>
    %5 = tpu.matmul %3, %4, %cst {dimension_numbers = #tpu.dot_dimension_numbers<[1], [0], [0], [1], [0, 0, 1, 1], [], []>} : vector<256x32xbf16>, vector<32x64xbf16>, vector<256x64xf32> -> vector<256x64xf32>
    %c0_4 = arith.constant 0 : index
    %c0_5 = arith.constant 0 : index
    %6 = vector.load %arg4[%c0_4, %c0_5] : memref<1x64xf32, #tpu.memory_space<vmem>>, vector<1x64xf32>
    %7 = vector.broadcast %6 : vector<1x64xf32> to vector<256x64xf32>
    %8 = arith.addf %5, %7 : vector<256x64xf32>
    %9 = vector.extract_strided_slice %8 {offsets = [0, 0], sizes = [256, 32], strides = [1, 1]} : vector<256x64xf32> to vector<256x32xf32>
    %10 = vector.extract_strided_slice %8 {offsets = [0, 32], sizes = [256, 32], strides = [1, 1]} : vector<256x64xf32> to vector<256x32xf32>
    %c1_i32 = arith.constant 1 : i32
    %11 = arith.muli %arg0, %c1_i32 : i32
    %12 = arith.addi %11, %arg1 : i32
    %c256_i32 = arith.constant 256 : i32
    %13 = arith.muli %12, %c256_i32 : i32
    %14 = tpu.iota {dimensions = array<i32: 0>} : vector<256x1xi32>
    %15 = vector.broadcast %13 : i32 to vector<256x1xi32>
    %16 = arith.addi %15, %14 : vector<256x1xi32>
    %c16_i32 = arith.constant 16 : i32
    %17 = vector.broadcast %c16_i32 : i32 to vector<256x1xi32>
    %18 = arith.cmpi slt, %16, %17 : vector<256x1xi32>
    %cst_6 = arith.constant dense<0xFF800000> : vector<256xf32>
    %19 = vector.multi_reduction <maximumf>, %9, %cst_6 [1] : vector<256x32xf32> to vector<256xf32>
    %20 = vector.shape_cast %19 : vector<256xf32> to vector<256x1xf32>
    %21 = vector.broadcast %20 : vector<256x1xf32> to vector<256x32xf32>
    %22 = arith.subf %9, %21 : vector<256x32xf32>
    %23 = math.exp %22 : vector<256x32xf32>
    %cst_7 = arith.constant dense<0.000000e+00> : vector<256xf32>
    %24 = vector.multi_reduction <add>, %23, %cst_7 [1] : vector<256x32xf32> to vector<256xf32>
    %25 = vector.shape_cast %24 : vector<256xf32> to vector<256x1xf32>
    %26 = math.log %25 : vector<256x1xf32>
    %27 = arith.addf %20, %26 : vector<256x1xf32>
    %cst_8 = arith.constant 0.000000e+00 : f32
    %28 = vector.broadcast %cst_8 : f32 to vector<256x1xf32>
    %29 = arith.select %18, %27, %28 : vector<256x1xi1>, vector<256x1xf32>
    %c0_9 = arith.constant 0 : index
    %c0_10 = arith.constant 0 : index
    %c0_11 = arith.constant 0 : index
    %30 = vector.load %arg6[%c0_9, %c0_10, %c0_11] : memref<1x1x1xf32, #tpu.memory_space<vmem>>, vector<1x1x1xf32>
    %31 = vector.shape_cast %29 : vector<256x1xf32> to vector<1x256x1xf32>
    %cst_12 = arith.constant dense<0.000000e+00> : vector<1xf32>
    %32 = vector.multi_reduction <add>, %31, %cst_12 [1, 2] : vector<1x256x1xf32> to vector<1xf32>
    %33 = vector.shape_cast %32 : vector<1xf32> to vector<1x1x1xf32>
    %34 = vector.extract %33[0, 0, 0] : f32 from vector<1x1x1xf32>
    %35 = vector.broadcast %34 : f32 to vector<1x1xf32>
    %36 = vector.shape_cast %35 : vector<1x1xf32> to vector<1x1x1xf32>
    %cst_13 = arith.constant 0.000000e+00 : f32
    %37 = vector.broadcast %cst_13 : f32 to vector<1x1x1xf32>
    %38 = arith.subf %37, %36 : vector<1x1x1xf32>
    %39 = arith.addf %30, %38 : vector<1x1x1xf32>
    %c0_14 = arith.constant 0 : index
    %c0_15 = arith.constant 0 : index
    %c0_16 = arith.constant 0 : index
    %40 = vector.load %arg6[%c0_14, %c0_15, %c0_16] : memref<1x1x1xf32, #tpu.memory_space<vmem>>, vector<1x1x1xf32>
    tpu.vector_store %arg6[%c0_14, %c0_15, %c0_16], %39 {strides = array<i32>} : memref<1x1x1xf32, #tpu.memory_space<vmem>>, vector<1x1x1xf32>,
    %cst_17 = arith.constant dense<0xFF800000> : vector<256xf32>
    %41 = vector.multi_reduction <maximumf>, %10, %cst_17 [1] : vector<256x32xf32> to vector<256xf32>
    %42 = vector.shape_cast %41 : vector<256xf32> to vector<256x1xf32>
    %43 = vector.broadcast %42 : vector<256x1xf32> to vector<256x32xf32>
    %44 = arith.subf %10, %43 : vector<256x32xf32>
    %45 = math.exp %44 : vector<256x32xf32>
    %cst_18 = arith.constant dense<0.000000e+00> : vector<256xf32>
    %46 = vector.multi_reduction <add>, %45, %cst_18 [1] : vector<256x32xf32> to vector<256xf32>
    %47 = vector.shape_cast %46 : vector<256xf32> to vector<256x1xf32>
    %48 = math.log %47 : vector<256x1xf32>
    %49 = arith.addf %42, %48 : vector<256x1xf32>
    %c0_19 = arith.constant 0 : index
    %c0_20 = arith.constant 0 : index
    %50 = vector.load %arg5[%c0_19, %c0_20] : memref<256x1xi32, #tpu.memory_space<vmem>>, vector<256x1xi32>
    %51 = tpu.iota {dimensions = array<i32: 1>} : vector<256x32xi32>
    %52 = vector.broadcast %50 : vector<256x1xi32> to vector<256x32xi32>
    %53 = arith.cmpi eq, %51, %52 : vector<256x32xi32>
    %cst_21 = arith.constant 0.000000e+00 : f32
    %54 = vector.broadcast %cst_21 : f32 to vector<256x32xf32>
    %55 = arith.select %53, %10, %54 : vector<256x32xi1>, vector<256x32xf32>
    %cst_22 = arith.constant dense<0.000000e+00> : vector<256xf32>
    %56 = vector.multi_reduction <add>, %55, %cst_22 [1] : vector<256x32xf32> to vector<256xf32>
    %57 = vector.shape_cast %56 : vector<256xf32> to vector<256x1xf32>
    %58 = arith.subf %49, %57 : vector<256x1xf32>
    %cst_23 = arith.constant 0.000000e+00 : f32
    %59 = vector.broadcast %cst_23 : f32 to vector<256x1xf32>
    %60 = arith.select %18, %58, %59 : vector<256x1xi1>, vector<256x1xf32>
    %c0_24 = arith.constant 0 : index
    %c0_25 = arith.constant 0 : index
    %c0_26 = arith.constant 0 : index
    %61 = vector.load %arg7[%c0_24, %c0_25, %c0_26] : memref<1x1x1xf32, #tpu.memory_space<vmem>>, vector<1x1x1xf32>
    %62 = vector.shape_cast %60 : vector<256x1xf32> to vector<1x256x1xf32>
    %cst_27 = arith.constant dense<0.000000e+00> : vector<1xf32>
    %63 = vector.multi_reduction <add>, %62, %cst_27 [1, 2] : vector<1x256x1xf32> to vector<1xf32>
    %64 = vector.shape_cast %63 : vector<1xf32> to vector<1x1x1xf32>
    %65 = vector.extract %64[0, 0, 0] : f32 from vector<1x1x1xf32>
    %66 = vector.broadcast %65 : f32 to vector<1x1xf32>
    %67 = vector.shape_cast %66 : vector<1x1xf32> to vector<1x1x1xf32>
    %68 = arith.addf %61, %67 : vector<1x1x1xf32>
    %c0_28 = arith.constant 0 : index
    %c0_29 = arith.constant 0 : index
    %c0_30 = arith.constant 0 : index
    %69 = vector.load %arg7[%c0_28, %c0_29, %c0_30] : memref<1x1x1xf32, #tpu.memory_space<vmem>>, vector<1x1x1xf32>
    tpu.vector_store %arg7[%c0_28, %c0_29, %c0_30], %68 {strides = array<i32>} : memref<1x1x1xf32, #tpu.memory_space<vmem>>, vector<1x1x1xf32>,
    %70 = arith.cmpf oge, %57, %42 : vector<256x1xf32>
    %71 = arith.andi %18, %70 : vector<256x1xi1>
    %cst_31 = arith.constant 1.000000e+00 : f32
    %cst_32 = arith.constant 0.000000e+00 : f32
    %72 = vector.broadcast %cst_31 : f32 to vector<256x1xf32>
    %73 = vector.broadcast %cst_32 : f32 to vector<256x1xf32>
    %74 = arith.select %71, %72, %73 : vector<256x1xi1>, vector<256x1xf32>
    %c0_33 = arith.constant 0 : index
    %c0_34 = arith.constant 0 : index
    %c0_35 = arith.constant 0 : index
    %75 = vector.load %arg8[%c0_33, %c0_34, %c0_35] : memref<1x1x1xf32, #tpu.memory_space<vmem>>, vector<1x1x1xf32>
    %76 = vector.shape_cast %74 : vector<256x1xf32> to vector<1x256x1xf32>
    %cst_36 = arith.constant dense<0.000000e+00> : vector<1xf32>
    %77 = vector.multi_reduction <add>, %76, %cst_36 [1, 2] : vector<1x256x1xf32> to vector<1xf32>
    %78 = vector.shape_cast %77 : vector<1xf32> to vector<1x1x1xf32>
    %79 = vector.extract %78[0, 0, 0] : f32 from vector<1x1x1xf32>
    %80 = vector.broadcast %79 : f32 to vector<1x1xf32>
    %81 = vector.shape_cast %80 : vector<1x1xf32> to vector<1x1x1xf32>
    %82 = arith.addf %75, %81 : vector<1x1x1xf32>
    %c0_37 = arith.constant 0 : index
    %c0_38 = arith.constant 0 : index
    %c0_39 = arith.constant 0 : index
    %83 = vector.load %arg8[%c0_37, %c0_38, %c0_39] : memref<1x1x1xf32, #tpu.memory_space<vmem>>, vector<1x1x1xf32>
    tpu.vector_store %arg8[%c0_37, %c0_38, %c0_39], %82 {strides = array<i32>} : memref<1x1x1xf32, #tpu.memory_space<vmem>>, vector<1x1x1xf32>,
    %84 = arith.mulf %9, %9 : vector<256x32xf32>
    %cst_40 = arith.constant dense<0.000000e+00> : vector<256xf32>
    %85 = vector.multi_reduction <add>, %84, %cst_40 [1] : vector<256x32xf32> to vector<256xf32>
    %86 = vector.shape_cast %85 : vector<256xf32> to vector<256x1xf32>
    %cst_41 = arith.constant 0.000000e+00 : f32
    %87 = vector.broadcast %cst_41 : f32 to vector<256x1xf32>
    %88 = arith.select %18, %86, %87 : vector<256x1xi1>, vector<256x1xf32>
    %c0_42 = arith.constant 0 : index
    %c0_43 = arith.constant 0 : index
    %c0_44 = arith.constant 0 : index
    %89 = vector.load %arg9[%c0_42, %c0_43, %c0_44] : memref<1x1x1xf32, #tpu.memory_space<vmem>>, vector<1x1x1xf32>
    %90 = vector.shape_cast %88 : vector<256x1xf32> to vector<1x256x1xf32>
    %cst_45 = arith.constant dense<0.000000e+00> : vector<1xf32>
    %91 = vector.multi_reduction <add>, %90, %cst_45 [1, 2] : vector<1x256x1xf32> to vector<1xf32>
    %92 = vector.shape_cast %91 : vector<1xf32> to vector<1x1x1xf32>
    %93 = vector.extract %92[0, 0, 0] : f32 from vector<1x1x1xf32>
    %94 = vector.broadcast %93 : f32 to vector<1x1xf32>
    %95 = vector.shape_cast %94 : vector<1x1xf32> to vector<1x1x1xf32>
    %96 = arith.addf %89, %95 : vector<1x1x1xf32>
    %c0_46 = arith.constant 0 : index
    %c0_47 = arith.constant 0 : index
    %c0_48 = arith.constant 0 : index
    %97 = vector.load %arg9[%c0_46, %c0_47, %c0_48] : memref<1x1x1xf32, #tpu.memory_space<vmem>>, vector<1x1x1xf32>
    tpu.vector_store %arg9[%c0_46, %c0_47, %c0_48], %96 {strides = array<i32>} : memref<1x1x1xf32, #tpu.memory_space<vmem>>, vector<1x1x1xf32>,
    return
  }
  func.func @transform_0(%arg0: i32, %arg1: i32) -> (i32, i32) {
    %c1_i32 = arith.constant 1 : i32
    %0 = arith.muli %arg0, %c1_i32 : i32
    %1 = arith.addi %0, %arg1 : i32
    %c0_i32 = arith.constant 0 : i32
    %c0_i32_0 = arith.constant 0 : i32
    return %1, %c0_i32 : i32, i32
  }
  func.func @transform_1(%arg0: i32, %arg1: i32) -> (i32, i32) {
    %c0_i32 = arith.constant 0 : i32
    %c0_i32_0 = arith.constant 0 : i32
    %c0_i32_1 = arith.constant 0 : i32
    return %c0_i32, %c0_i32_0 : i32, i32
  }
  func.func @transform_2(%arg0: i32, %arg1: i32) -> (i32, i32) {
    %c0_i32 = arith.constant 0 : i32
    %c0_i32_0 = arith.constant 0 : i32
    %c0_i32_1 = arith.constant 0 : i32
    return %c0_i32, %c0_i32_0 : i32, i32
  }
  func.func @transform_3(%arg0: i32, %arg1: i32) -> (i32, i32) {
    %c1_i32 = arith.constant 1 : i32
    %0 = arith.muli %arg0, %c1_i32 : i32
    %1 = arith.addi %0, %arg1 : i32
    %c0_i32 = arith.constant 0 : i32
    %c0_i32_0 = arith.constant 0 : i32
    return %1, %c0_i32 : i32, i32
  }
  func.func @transform_4(%arg0: i32, %arg1: i32) -> (i32, i32, i32) {
    %c0_i32 = arith.constant 0 : i32
    %c0_i32_0 = arith.constant 0 : i32
    %c0_i32_1 = arith.constant 0 : i32
    return %arg0, %c0_i32, %c0_i32_0 : i32, i32, i32
  }
  func.func @transform_5(%arg0: i32, %arg1: i32) -> (i32, i32, i32) {
    %c0_i32 = arith.constant 0 : i32
    %c0_i32_0 = arith.constant 0 : i32
    %c0_i32_1 = arith.constant 0 : i32
    return %arg0, %c0_i32, %c0_i32_0 : i32, i32, i32
  }
  func.func @transform_6(%arg0: i32, %arg1: i32) -> (i32, i32, i32) {
    %c0_i32 = arith.constant 0 : i32
    %c0_i32_0 = arith.constant 0 : i32
    %c0_i32_1 = arith.constant 0 : i32
    return %arg0, %c0_i32, %c0_i32_0 : i32, i32, i32
  }
  func.func @transform_7(%arg0: i32, %arg1: i32) -> (i32, i32, i32) {
    %c0_i32 = arith.constant 0 : i32
    %c0_i32_0 = arith.constant 0 : i32
    %c0_i32_1 = arith.constant 0 : i32
    return %arg0, %c0_i32, %c0_i32_0 : i32, i32, i32
  }
}

</mosaic_0001>

<llo_original>
// kernel: tpu_custom_call.1
$region0: #{tpu_custom_call.1}
  #allocation0 [shape = 'u32[]', space=smem, size = 0x4, offset = 0x4, fixed_abs, tag = 'smem constant byte address 0x4 - core index']
  #allocation1 [shape = 'u32[144,128]{1,0:T(1,128)}', space=vmem, size = 0x12000, scoped, tag = 'internal scratch']
  %s0 = inlined_call_operand.vmem [shape: bf16[512,32], index: 0, kind: input, shape index: {}]
  %s1 = inlined_call_operand.vmem [shape: bf16[32,64], index: 1, kind: input, shape index: {}]
  %s2 = inlined_call_operand.vmem [shape: f32[1,64], index: 2, kind: input, shape index: {}]
  %s3 = inlined_call_operand.vmem [shape: s32[512,1], index: 3, kind: input, shape index: {}]
  %s4 = inlined_call_operand.vmem [shape: f32[2,1,1], index: 4, kind: output, shape index: {0}]
  %s5 = inlined_call_operand.vmem [shape: f32[2,1,1], index: 5, kind: output, shape index: {1}]
  %s6 = inlined_call_operand.vmem [shape: f32[2,1,1], index: 6, kind: output, shape index: {2}]
  %s7 = inlined_call_operand.vmem [shape: f32[2,1,1], index: 7, kind: output, shape index: {3}]
  %8 = xla_tuple %s4, %s5, %s6, %s7
  %s9 = sld [smem:[#allocation0]]
  $region77: #{tpu_custom_call.1} parent=0
    _
  %s11 = ssub.s32 1, %s9
  %s12 = scalar_select 0, %s11, %s9
  loop: start=0, step=1, limit=4
  $region2: #{tpu_custom_call.1} parent=0 // loop_pre_header
    _
  $region3: #{tpu_custom_call.1} parent=0 // loop_header
    %s14 = sphi 0, %s18
    %p15 = scmp.ge.s32.totalorder %s14, 4
    %s21 = sphi 0, %s33
    %s22 = sphi 0, %s29
    %s23 = sphi 0, %s21
    %s24 = sphi 0, %s22
    %s25 = sphi 0, %s23
    %s26 = sphi 0, %s24
    %s38 = sphi 0, %s40
    %s41 = sphi 0, %s38
    %s42 = sphi 0, %s41
    %s58 = sphi 0, %s42
    %s62 = sphi 0, %s62
    %s64 = sphi 0, %s62
    %s65 = sphi 0, %s64
    %s79 = sphi 0, %s65
    %s83 = sphi 0, %s83
    %s85 = sphi 0, %s83
    %s86 = sphi 0, %s85
    %s100 = sphi 0, %s86
    %s108 = sphi 0, %s110
    %s111 = sphi 0, %s108
    %s112 = sphi 0, %s111
    %s128 = sphi 0, %s112
    %s134 = sphi 0, %s136
    %s137 = sphi 0, %s134
    %s138 = sphi 0, %s137
    %s154 = sphi 0, %s138
    %s160 = sphi 0, %s162
    %s163 = sphi 0, %s160
    %s164 = sphi 0, %s163
    %s180 = sphi 0, %s164
    %s186 = sphi 0, %s188
    %s189 = sphi 0, %s186
    %s190 = sphi 0, %s189
    %s206 = sphi 0, %s190
    %s212 = sphi 0, %s214
    %s215 = sphi 0, %s212
    %s216 = sphi 0, %s215
    %s232 = sphi 0, %s216
  $region4: #{tpu_custom_call.1} parent=0 // loop_header_branch
    %17 = sbr.rel (%p15) target = $region8
  $region5: #{tpu_custom_call.1} parent=0 // loop_body
    %s19 = ssub.s32 %s14, 1
    %s20 = ssub.s32 %s14, 2
    %s27 = sadd.s32 1, %s22
    %p28 = scmp.ge.s32.totalorder %s27, 1
    %s29 = scalar_select %p28, 0, %s27
    %s30 = sadd.s32 1, %s21
    %s31 = scalar_select %p28, %s30, %s21
    %p32 = scmp.ge.s32.totalorder %s31, 2
    %s33 = scalar_select %p32, 0, %s31
    %s34 = sadd.s32 %s21, %s22
    %s35 = sadd.s32 %s33, %s29
    %s36 = ssub.s32 %s34, %s35
    %p37 = scmp.eq.s32.totalorder %s36, 0
    %s39 = sadd.s32 %s38, 1
    %s40 = scalar_select %p37, %s38, %s39
    %p43 = pneg %p37
    %p44 = scmp.eq.s32.totalorder %s14, 1
    %p45 = por %p43, %p44
    %p46 = scmp.ne.s32.totalorder %s38, %s41
    %p47 = scmp.eq.s32.totalorder %s14, 0
    %p48 = por %p46, %p47
    %p49 = scmp.ne.s32.totalorder %s38, %s41
    %p50 = scmp.eq.s32.totalorder %s19, 1
    %p51 = por %p49, %p50
    %p52 = scmp.ne.s32.totalorder %s41, %s42
    %p53 = scmp.eq.s32.totalorder %s19, 0
    %p54 = por %p52, %p53
    %p55 = scmp.ne.s32.totalorder %s41, %s42
    %p56 = scmp.eq.s32.totalorder %s20, 1
    %p57 = por %p55, %p56
    %p59 = scmp.ne.s32.totalorder %s42, %s58
    %p60 = scmp.eq.s32.totalorder %s20, 0
    %p61 = por %p59, %p60
    %s63 = sadd.s32 %s62, 1
    %p66 = scmp.eq.s32.totalorder %s14, 1
    %p67 = scmp.ne.s32.totalorder %s62, %s64
    %p68 = scmp.eq.s32.totalorder %s14, 0
    %p69 = por %p67, %p68
    %p70 = scmp.ne.s32.totalorder %s62, %s64
    %p71 = scmp.eq.s32.totalorder %s19, 1
    %p72 = por %p70, %p71
    %p73 = scmp.ne.s32.totalorder %s64, %s65
    %p74 = scmp.eq.s32.totalorder %s19, 0
    %p75 = por %p73, %p74
    %p76 = scmp.ne.s32.totalorder %s64, %s65
    %p77 = scmp.eq.s32.totalorder %s20, 1
    %p78 = por %p76, %p77
    %p80 = scmp.ne.s32.totalorder %s65, %s79
    %p81 = scmp.eq.s32.totalorder %s20, 0
    %p82 = por %p80, %p81
    %s84 = sadd.s32 %s83, 1
    %p87 = scmp.eq.s32.totalorder %s14, 1
    %p88 = scmp.ne.s32.totalorder %s83, %s85
    %p89 = scmp.eq.s32.totalorder %s14, 0
    %p90 = por %p88, %p89
    %p91 = scmp.ne.s32.totalorder %s83, %s85
    %p92 = scmp.eq.s32.totalorder %s19, 1
    %p93 = por %p91, %p92
    %p94 = scmp.ne.s32.totalorder %s85, %s86
    %p95 = scmp.eq.s32.totalorder %s19, 0
    %p96 = por %p94, %p95
    %p97 = scmp.ne.s32.totalorder %s85, %s86
    %p98 = scmp.eq.s32.totalorder %s20, 1
    %p99 = por %p97, %p98
    %p101 = scmp.ne.s32.totalorder %s86, %s100
    %p102 = scmp.eq.s32.totalorder %s20, 0
    %p103 = por %p101, %p102
    %s104 = sadd.s32 %s21, %s22
    %s105 = sadd.s32 %s33, %s29
    %s106 = ssub.s32 %s104, %s105
    %p107 = scmp.eq.s32.totalorder %s106, 0
    %s109 = sadd.s32 %s108, 1
    %s110 = scalar_select %p107, %s108, %s109
    %p113 = pneg %p107
    %p114 = scmp.eq.s32.totalorder %s14, 1
    %p115 = por %p113, %p114
    %p116 = scmp.ne.s32.totalorder %s108, %s111
    %p117 = scmp.eq.s32.totalorder %s14, 0
    %p118 = por %p116, %p117
    %p119 = scmp.ne.s32.totalorder %s108, %s111
    %p120 = scmp.eq.s32.totalorder %s19, 1
    %p121 = por %p119, %p120
    %p122 = scmp.ne.s32.totalorder %s111, %s112
    %p123 = scmp.eq.s32.totalorder %s19, 0
    %p124 = por %p122, %p123
    %p125 = scmp.ne.s32.totalorder %s111, %s112
    %p126 = scmp.eq.s32.totalorder %s20, 1
    %p127 = por %p125, %p126
    %p129 = scmp.ne.s32.totalorder %s112, %s128
    %p130 = scmp.eq.s32.totalorder %s20, 0
    %p131 = por %p129, %p130
    %s132 = ssub.s32 %s21, %s33
    %p133 = scmp.eq.s32.totalorder %s132, 0
    %s135 = sadd.s32 %s134, 1
    %s136 = scalar_select %p133, %s134, %s135
    %p139 = pneg %p133
    %p140 = scmp.eq.s32.totalorder %s14, 1
    %p141 = por %p139, %p140
    %p142 = scmp.ne.s32.totalorder %s134, %s137
    %p143 = scmp.eq.s32.totalorder %s14, 0
    %p144 = por %p142, %p143
    %p145 = scmp.ne.s32.totalorder %s134, %s137
    %p146 = scmp.eq.s32.totalorder %s19, 1
    %p147 = por %p145, %p146
    %p148 = scmp.ne.s32.totalorder %s137, %s138
    %p149 = scmp.eq.s32.totalorder %s19, 0
    %p150 = por %p148, %p149
    %p151 = scmp.ne.s32.totalorder %s137, %s138
    %p152 = scmp.eq.s32.totalorder %s20, 1
    %p153 = por %p151, %p152
    %p155 = scmp.ne.s32.totalorder %s138, %s154
    %p156 = scmp.eq.s32.totalorder %s20, 0
    %p157 = por %p155, %p156
    %s158 = ssub.s32 %s21, %s33
    %p159 = scmp.eq.s32.totalorder %s158, 0
    %s161 = sadd.s32 %s160, 1
    %s162 = scalar_select %p159, %s160, %s161
    %p165 = pneg %p159
    %p166 = scmp.eq.s32.totalorder %s14, 1
    %p167 = por %p165, %p166
    %p168 = scmp.ne.s32.totalorder %s160, %s163
    %p169 = scmp.eq.s32.totalorder %s14, 0
    %p170 = por %p168, %p169
    %p171 = scmp.ne.s32.totalorder %s160, %s163
    %p172 = scmp.eq.s32.totalorder %s19, 1
    %p173 = por %p171, %p172
    %p174 = scmp.ne.s32.totalorder %s163, %s164
    %p175 = scmp.eq.s32.totalorder %s19, 0
    %p176 = por %p174, %p175
    %p177 = scmp.ne.s32.totalorder %s163, %s164
    %p178 = scmp.eq.s32.totalorder %s20, 1
    %p179 = por %p177, %p178
    %p181 = scmp.ne.s32.totalorder %s164, %s180
    %p182 = scmp.eq.s32.totalorder %s20, 0
    %p183 = por %p181, %p182
    %s184 = ssub.s32 %s21, %s33
    %p185 = scmp.eq.s32.totalorder %s184, 0
    %s187 = sadd.s32 %s186, 1
    %s188 = scalar_select %p185, %s186, %s187
    %p191 = pneg %p185
    %p192 = scmp.eq.s32.totalorder %s14, 1
    %p193 = por %p191, %p192
    %p194 = scmp.ne.s32.totalorder %s186, %s189
    %p195 = scmp.eq.s32.totalorder %s14, 0
    %p196 = por %p194, %p195
    %p197 = scmp.ne.s32.totalorder %s186, %s189
    %p198 = scmp.eq.s32.totalorder %s19, 1
    %p199 = por %p197, %p198
    %p200 = scmp.ne.s32.totalorder %s189, %s190
    %p201 = scmp.eq.s32.totalorder %s19, 0
    %p202 = por %p200, %p201
    %p203 = scmp.ne.s32.totalorder %s189, %s190
    %p204 = scmp.eq.s32.totalorder %s20, 1
    %p205 = por %p203, %p204
    %p207 = scmp.ne.s32.totalorder %s190, %s206
    %p208 = scmp.eq.s32.totalorder %s20, 0
    %p209 = por %p207, %p208
    %s210 = ssub.s32 %s21, %s33
    %p211 = scmp.eq.s32.totalorder %s210, 0
    %s213 = sadd.s32 %s212, 1
    %s214 = scalar_select %p211, %s212, %s213
    %p217 = pneg %p211
    %p218 = scmp.eq.s32.totalorder %s14, 1
    %p219 = por %p217, %p218
    %p220 = scmp.ne.s32.totalorder %s212, %s215
    %p221 = scmp.eq.s32.totalorder %s14, 0
    %p222 = por %p220, %p221
    %p223 = scmp.ne.s32.totalorder %s212, %s215
    %p224 = scmp.eq.s32.totalorder %s19, 1
    %p225 = por %p223, %p224
    %p226 = scmp.ne.s32.totalorder %s215, %s216
    %p227 = scmp.eq.s32.totalorder %s19, 0
    %p228 = por %p226, %p227
    %p229 = scmp.ne.s32.totalorder %s215, %s216
    %p230 = scmp.eq.s32.totalorder %s20, 1
    %p231 = por %p229, %p230
    %p233 = scmp.ne.s32.totalorder %s216, %s232
    %p234 = scmp.eq.s32.totalorder %s20, 0
    %p235 = por %p233, %p234
    %p236 = scmp.le.s32.totalorder 1, %s14
    %p237 = scmp.lt.s32.totalorder %s14, 3
    %p238 = pnand %p236, %p237
    %p239 = pneg %p238
    // Predicated region
    $region9: #{tpu_custom_call.1} parent=5 // pred_check
      _
    $region10: #{tpu_custom_call.1} parent=5 // pred_check_branch
      %241 = sbr.rel (%p238) target = $region12
    $region11: #{tpu_custom_call.1} parent=5 // pred_region
      %s242 = ssub.s32 %s14, 1
      // Predicated region
      $region13: #{tpu_custom_call.1} parent=11 // pred_check
        %p243 = pneg %p75
      $region14: #{tpu_custom_call.1} parent=11 // pred_check_branch
        %245 = sbr.rel (%p243) target = $region16
      $region15: #{tpu_custom_call.1} parent=11 // pred_region
        _
      $region16: #{tpu_custom_call.1} parent=11 // pred_fallthru
        _
      // Predicated region
      $region17: #{tpu_custom_call.1} parent=11 // pred_check
        %p246 = pneg %p96
      $region18: #{tpu_custom_call.1} parent=11 // pred_check_branch
        %248 = sbr.rel (%p246) target = $region20
      $region19: #{tpu_custom_call.1} parent=11 // pred_region
        _
      $region20: #{tpu_custom_call.1} parent=11 // pred_fallthru
        _
    $region12: #{tpu_custom_call.1} parent=5 // pred_fallthru
      _
    %p249 = scmp.lt.s32.totalorder %s14, 2
    // Predicated region
    $region21: #{tpu_custom_call.1} parent=5 // pred_check
      %p250 = pneg %p249
    $region22: #{tpu_custom_call.1} parent=5 // pred_check_branch
      %252 = sbr.rel (%p250) target = $region24
    $region23: #{tpu_custom_call.1} parent=5 // pred_region
      // Predicated region
      $region25: #{tpu_custom_call.1} parent=23 // pred_check
        %p253 = pneg %p48
      $region26: #{tpu_custom_call.1} parent=23 // pred_check_branch
        %255 = sbr.rel (%p253) target = $region28
      $region27: #{tpu_custom_call.1} parent=23 // pred_region
        %s256 = sadd.s32 %s21, %s22
        %s257 = smul.u32 32, %s256
        %p258 = scmp.lt.s32.totalorder %s257, 63
        %s259 = scalar_select %p258, %s257, 63
        %s260 = smul.addr %s259, 4
        %s261 = scalar_lea.vmem %s0, %s260
        %s262 = sadd.s32 %s21, %s22
        %s263 = smul.u32 32, %s262
      $region28: #{tpu_custom_call.1} parent=23 // pred_fallthru
        _
      // Predicated region
      $region29: #{tpu_custom_call.1} parent=23 // pred_check
        %p264 = pneg %p118
      $region30: #{tpu_custom_call.1} parent=23 // pred_check_branch
        %266 = sbr.rel (%p264) target = $region32
      $region31: #{tpu_custom_call.1} parent=23 // pred_region
        %s267 = sadd.s32 %s21, %s22
        %s268 = smul.u32 32, %s267
        %p269 = scmp.lt.s32.totalorder %s268, 63
        %s270 = scalar_select %p269, %s268, 63
        %s271 = smul.addr %s270, 8
        %s272 = scalar_lea.vmem %s3, %s271
        %s273 = sadd.s32 %s21, %s22
        %s274 = smul.u32 32, %s273
      $region32: #{tpu_custom_call.1} parent=23 // pred_fallthru
        _
    $region24: #{tpu_custom_call.1} parent=5 // pred_fallthru
      _
    %p275 = scmp.le.s32.totalorder 1, %s14
    %p276 = scmp.lt.s32.totalorder %s14, 3
    %p277 = pnand %p275, %p276
    %p278 = pneg %p277
    // Predicated region
    $region33: #{tpu_custom_call.1} parent=5 // pred_check
      _
    $region34: #{tpu_custom_call.1} parent=5 // pred_check_branch
      %280 = sbr.rel (%p277) target = $region36
    $region35: #{tpu_custom_call.1} parent=5 // pred_region
      %s281 = ssub.s32 %s14, 1
      %s282 = sadd.s32 %s23, %s24
      %s283 = smul.u32 32, %s282
      %p284 = scmp.lt.s32.totalorder %s283, 63
      %s285 = scalar_select %p284, %s283, 63
      %s286 = smul.addr %s285, 4
      %s287 = scalar_lea.vmem %s0, %s286
      %p288 = pneg %p54
      %p289 = pneg %p51
      %p290 = pneg %p75
      %p291 = pneg %p72
      %p292 = pneg %p96
      %p293 = pneg %p93
      %s294 = sadd.s32 %s23, %s24
      %s295 = smul.u32 32, %s294
      %p296 = scmp.lt.s32.totalorder %s295, 63
      %s297 = scalar_select %p296, %s295, 63
      %s298 = smul.addr %s297, 8
      %s299 = scalar_lea.vmem %s3, %s298
      %p300 = pneg %p124
      %p301 = pneg %p121
      %p302 = pneg %p150
      %p303 = pneg %p147
      %p304 = scmp.lt.s32.totalorder %s23, 1
      %s305 = scalar_select %p304, %s23, 1
      %s306 = scalar_lea.vmem %s4, %s305
      %p307 = pneg %p176
      %p308 = pneg %p173
      %p309 = scmp.lt.s32.totalorder %s23, 1
      %s310 = scalar_select %p309, %s23, 1
      %s311 = scalar_lea.vmem %s5, %s310
      %p312 = pneg %p202
      %p313 = pneg %p199
      %p314 = scmp.lt.s32.totalorder %s23, 1
      %s315 = scalar_select %p314, %s23, 1
      %s316 = scalar_lea.vmem %s6, %s315
      %p317 = pneg %p228
      %p318 = pneg %p225
      %p319 = scmp.lt.s32.totalorder %s23, 1
      %s320 = scalar_select %p319, %s23, 1
      %s321 = scalar_lea.vmem %s7, %s320
      %s322 = sadd.s32 %s23, %s24
      %s323 = smul.u32 32, %s322
      %p324 = scmp.lt.s32.totalorder %s323, 63
      %s325 = scalar_select %p324, %s323, 63
      %s326 = smul.addr %s325, 4
      %s327 = scalar_lea.vmem %s0, %s326
      %s328 = sadd.s32 %s23, %s24
      %s329 = smul.u32 32, %s328
      %s330 = sadd.s32 %s23, %s24
      %s331 = smul.u32 32, %s330
      %p332 = scmp.lt.s32.totalorder %s331, 63
      %s333 = scalar_select %p332, %s331, 63
      %s334 = smul.addr %s333, 8
      %s335 = scalar_lea.vmem %s3, %s334
      %s336 = sadd.s32 %s23, %s24
      %s337 = smul.u32 32, %s336
      %p338 = scmp.lt.s32.totalorder %s23, 1
      %s339 = scalar_select %p338, %s23, 1
      %s340 = scalar_lea.vmem %s4, %s339
      %p341 = scmp.lt.s32.totalorder %s23, 1
      %s342 = scalar_select %p341, %s23, 1
      %s343 = scalar_lea.vmem %s5, %s342
      %p344 = scmp.lt.s32.totalorder %s23, 1
      %s345 = scalar_select %p344, %s23, 1
      %s346 = scalar_lea.vmem %s6, %s345
      %p347 = scmp.lt.s32.totalorder %s23, 1
      %s348 = scalar_select %p347, %s23, 1
      %s349 = scalar_lea.vmem %s7, %s348
      %p351 = scmp.eq.s32.totalorder %s24, 0
      // Predicated region
      $region37: #{tpu_custom_call.1} parent=35 // pred_check
        %p352 = pneg %p351
      $region38: #{tpu_custom_call.1} parent=35 // pred_check_branch
        %354 = sbr.rel (%p352) target = $region40
      $region39: #{tpu_custom_call.1} parent=35 // pred_region
        %vm355 = vcmask 0
        %356 = vst.msk [vmem:[%s340] sm:$0x1] %vm355, 0.0
        %357 = vst.msk [vmem:[%s343] sm:$0x1] %vm355, 0.0
        %358 = vst.msk [vmem:[%s346] sm:$0x1] %vm355, 0.0
        %359 = vst.msk [vmem:[%s349] sm:$0x1] %vm355, 0.0
      $region40: #{tpu_custom_call.1} parent=35 // pred_fallthru
        _
      %v360 = vld [vmem:[%s327] sm:$0xf]
      %v361 = vld [vmem:[%s327 + $0x4] sm:$0xf]
      %v362 = vld [vmem:[%s327 + $0x8] sm:$0xf]
      %v363 = vld [vmem:[%s327 + $0xc] sm:$0xf]
      %v364 = vld [vmem:[%s327 + $0x10] sm:$0xf]
      %v365 = vld [vmem:[%s327 + $0x14] sm:$0xf]
      %v366 = vld [vmem:[%s327 + $0x18] sm:$0xf]
      %v367 = vld [vmem:[%s327 + $0x1c] sm:$0xf]
      %v368 = vld [vmem:[%s327 + $0x20] sm:$0xf]
      %v369 = vld [vmem:[%s327 + $0x24] sm:$0xf]
      %v370 = vld [vmem:[%s327 + $0x28] sm:$0xf]
      %v371 = vld [vmem:[%s327 + $0x2c] sm:$0xf]
      %v372 = vld [vmem:[%s327 + $0x30] sm:$0xf]
      %v373 = vld [vmem:[%s327 + $0x34] sm:$0xf]
      %v374 = vld [vmem:[%s327 + $0x38] sm:$0xf]
      %v375 = vld [vmem:[%s327 + $0x3c] sm:$0xf]
      %v376 = vld [vmem:[%s327 + $0x40] sm:$0xf]
      %v377 = vld [vmem:[%s327 + $0x44] sm:$0xf]
      %v378 = vld [vmem:[%s327 + $0x48] sm:$0xf]
      %v379 = vld [vmem:[%s327 + $0x4c] sm:$0xf]
      %v380 = vld [vmem:[%s327 + $0x50] sm:$0xf]
      %v381 = vld [vmem:[%s327 + $0x54] sm:$0xf]
      %v382 = vld [vmem:[%s327 + $0x58] sm:$0xf]
      %v383 = vld [vmem:[%s327 + $0x5c] sm:$0xf]
      %v384 = vld [vmem:[%s327 + $0x60] sm:$0xf]
      %v385 = vld [vmem:[%s327 + $0x64] sm:$0xf]
      %v386 = vld [vmem:[%s327 + $0x68] sm:$0xf]
      %v387 = vld [vmem:[%s327 + $0x6c] sm:$0xf]
      %v388 = vld [vmem:[%s327 + $0x70] sm:$0xf]
      %v389 = vld [vmem:[%s327 + $0x74] sm:$0xf]
      %v390 = vld [vmem:[%s327 + $0x78] sm:$0xf]
      %v391 = vld [vmem:[%s327 + $0x7c] sm:$0xf]
      %v392 = vld [vmem:[%s1] sm:$0xf]
      %v393 = vld [vmem:[%s1 + $0x4] sm:$0xf]
      %v394 = vld [vmem:[%s1 + $0x8] sm:$0xf]
      %v395 = vld [vmem:[%s1 + $0xc] sm:$0xf]
      %v396 = vld [vmem:[%s2] sm:$0x1]
      %v398 = vlaneseq
      %v399 = vshrl.u32 %v398, 7
      %v400 = vsub.s32 0, %v399
      %v401 = vrot.slane %v396, %v400
      %v435 = vunpack.c.l.b16 %v360
      %v436 = vunpack.c.l.b16 %v361
      %v437 = vunpack.c.l.b16 %v362
      %v438 = vunpack.c.l.b16 %v363
      %v439 = vunpack.c.l.b16 %v364
      %v440 = vunpack.c.l.b16 %v365
      %v441 = vunpack.c.l.b16 %v366
      %v442 = vunpack.c.l.b16 %v367
      %v443 = vunpack.c.l.b16 %v368
      %v444 = vunpack.c.l.b16 %v369
      %v445 = vunpack.c.l.b16 %v370
      %v446 = vunpack.c.l.b16 %v371
      %v447 = vunpack.c.l.b16 %v372
      %v448 = vunpack.c.l.b16 %v373
      %v449 = vunpack.c.l.b16 %v374
      %v450 = vunpack.c.l.b16 %v375
      %v451 = vunpack.c.l.b16 %v376
      %v452 = vunpack.c.l.b16 %v377
      %v453 = vunpack.c.l.b16 %v378
      %v454 = vunpack.c.l.b16 %v379
      %v455 = vunpack.c.l.b16 %v380
      %v456 = vunpack.c.l.b16 %v381
      %v457 = vunpack.c.l.b16 %v382
      %v458 = vunpack.c.l.b16 %v383
      %v459 = vunpack.c.l.b16 %v384
      %v460 = vunpack.c.l.b16 %v385
      %v461 = vunpack.c.l.b16 %v386
      %v462 = vunpack.c.l.b16 %v387
      %v463 = vunpack.c.l.b16 %v388
      %v464 = vunpack.c.l.b16 %v389
      %v465 = vunpack.c.l.b16 %v390
      %v466 = vunpack.c.l.b16 %v391
      %v467 = vpack.c.b16 %v436, %v435
      %v468 = vpack.c.b16 %v438, %v437
      %v469 = vpack.c.b16 %v440, %v439
      %v470 = vpack.c.b16 %v442, %v441
      %v471 = vpack.c.b16 %v444, %v443
      %v472 = vpack.c.b16 %v446, %v445
      %v473 = vpack.c.b16 %v448, %v447
      %v474 = vpack.c.b16 %v450, %v449
      %v475 = vpack.c.b16 %v452, %v451
      %v476 = vpack.c.b16 %v454, %v453
      %v477 = vpack.c.b16 %v456, %v455
      %v478 = vpack.c.b16 %v458, %v457
      %v479 = vpack.c.b16 %v460, %v459
      %v480 = vpack.c.b16 %v462, %v461
      %v481 = vpack.c.b16 %v464, %v463
      %v482 = vpack.c.b16 %v466, %v465
      %v487 = vunpack.c.l.b16 %v392
      %v488 = vunpack.c.l.b16 %v393
      %v489 = vunpack.c.l.b16 %v394
      %v490 = vunpack.c.l.b16 %v395
      %v491 = vpack.c.b16 %v488, %v487
      %v492 = vpack.c.b16 %v490, %v489
      %vm495 = vcmask 261120
      %v497 = vsel %vm495, %v467, 0
      %v500 = vsel %vm495, %v468, 0
      %v503 = vsel %vm495, %v469, 0
      %v506 = vsel %vm495, %v470, 0
      %v509 = vsel %vm495, %v471, 0
      %v512 = vsel %vm495, %v472, 0
      %v515 = vsel %vm495, %v473, 0
      %v518 = vsel %vm495, %v474, 0
      %v521 = vsel %vm495, %v475, 0
      %v524 = vsel %vm495, %v476, 0
      %v527 = vsel %vm495, %v477, 0
      %v530 = vsel %vm495, %v478, 0
      %v533 = vsel %vm495, %v479, 0
      %v536 = vsel %vm495, %v480, 0
      %v539 = vsel %vm495, %v481, 0
      %v542 = vsel %vm495, %v482, 0
      %544 = vmatprep.subr.bf16.mxu0 0
      %545 = vmatpush1.bf16.msra.mxu0 %v491
      %546 = vmatprep.subr.bf16.mxu0 0
      %547 = vmatpush1.bf16.msra.mxu0 %v492
      %548 = vmatprep.subr.bf16.mxu0 0
      %549 = vmatpush1.bf16.msra.mxu0 0
      %550 = vmatprep.subr.bf16.mxu0 0
      %551 = vmatpush1.bf16.msra.mxu0 0
      %552 = vmatprep.subr.bf16.mxu0 0
      %553 = vmatpush1.bf16.msra.mxu0 0
      %554 = vmatprep.subr.bf16.mxu0 0
      %555 = vmatpush1.bf16.msra.mxu0 0
      %556 = vmatprep.subr.bf16.mxu0 0
      %557 = vmatpush1.bf16.msra.mxu0 0
      %558 = vmatprep.subr.bf16.mxu0 0
      %559 = vmatpush1.bf16.msra.mxu0 0
      %560 = vmatprep.subr.bf16.mxu0 0
      %561 = vmatpush1.bf16.msra.mxu0 0
      %562 = vmatprep.subr.bf16.mxu0 0
      %563 = vmatpush1.bf16.msra.mxu0 0
      %564 = vmatprep.subr.bf16.mxu0 0
      %565 = vmatpush1.bf16.msra.mxu0 0
      %566 = vmatprep.subr.bf16.mxu0 0
      %567 = vmatpush1.bf16.msra.mxu0 0
      %568 = vmatprep.subr.bf16.mxu0 0
      %569 = vmatpush1.bf16.msra.mxu0 0
      %570 = vmatprep.subr.bf16.mxu0 0
      %571 = vmatpush1.bf16.msra.mxu0 0
      %572 = vmatprep.subr.bf16.mxu0 0
      %573 = vmatpush1.bf16.msra.mxu0 0
      %574 = vmatprep.subr.bf16.mxu0 0
      %575 = vmatpush1.bf16.msra.mxu0 0
      %576 = vmatprep.mubr.bf16.mxu0 0
      %577 = vmatmul.mubr.bf16.gmra.mrb[0].mxu0 %v497
      %v578 = vpop.f32.mrb[0].mxu0
      %v579 = vadd.f32 %v401, %v578
      %v580 = vpop.f32.mrb[0].mxu0
      %v581 = vpop.f32.mrb[0].mxu0
      %v582 = vadd.f32 %v401, %v581
      %v583 = vpop.f32.mrb[0].mxu0
      %584 = vmatprep.mubr.bf16.mxu0 0
      %585 = vmatmul.mubr.bf16.gmra.mrb[0].mxu0 %v500
      %v586 = vpop.f32.mrb[0].mxu0
      %v587 = vadd.f32 %v401, %v586
      %v588 = vpop.f32.mrb[0].mxu0
      %v589 = vpop.f32.mrb[0].mxu0
      %v590 = vadd.f32 %v401, %v589
      %v591 = vpop.f32.mrb[0].mxu0
      %592 = vmatprep.mubr.bf16.mxu0 0
      %593 = vmatmul.mubr.bf16.gmra.mrb[0].mxu0 %v503
      %v594 = vpop.f32.mrb[0].mxu0
      %v595 = vadd.f32 %v401, %v594
      %v596 = vpop.f32.mrb[0].mxu0
      %v597 = vpop.f32.mrb[0].mxu0
      %v598 = vadd.f32 %v401, %v597
      %v599 = vpop.f32.mrb[0].mxu0
      %600 = vmatprep.mubr.bf16.mxu0 0
      %601 = vmatmul.mubr.bf16.gmra.mrb[0].mxu0 %v506
      %v602 = vpop.f32.mrb[0].mxu0
      %v603 = vadd.f32 %v401, %v602
      %v604 = vpop.f32.mrb[0].mxu0
      %v605 = vpop.f32.mrb[0].mxu0
      %v606 = vadd.f32 %v401, %v605
      %v607 = vpop.f32.mrb[0].mxu0
      %608 = vmatprep.mubr.bf16.mxu0 0
      %609 = vmatmul.mubr.bf16.gmra.mrb[0].mxu0 %v509
      %v610 = vpop.f32.mrb[0].mxu0
      %v611 = vadd.f32 %v401, %v610
      %v612 = vpop.f32.mrb[0].mxu0
      %v613 = vpop.f32.mrb[0].mxu0
      %v614 = vadd.f32 %v401, %v613
      %v615 = vpop.f32.mrb[0].mxu0
      %616 = vmatprep.mubr.bf16.mxu0 0
      %617 = vmatmul.mubr.bf16.gmra.mrb[0].mxu0 %v512
      %v618 = vpop.f32.mrb[0].mxu0
      %v619 = vadd.f32 %v401, %v618
      %v620 = vpop.f32.mrb[0].mxu0
      %v621 = vpop.f32.mrb[0].mxu0
      %v622 = vadd.f32 %v401, %v621
      %v623 = vpop.f32.mrb[0].mxu0
      %624 = vmatprep.mubr.bf16.mxu0 0
      %625 = vmatmul.mubr.bf16.gmra.mrb[0].mxu0 %v515
      %v626 = vpop.f32.mrb[0].mxu0
      %v627 = vadd.f32 %v401, %v626
      %v628 = vpop.f32.mrb[0].mxu0
      %v629 = vpop.f32.mrb[0].mxu0
      %v630 = vadd.f32 %v401, %v629
      %v631 = vpop.f32.mrb[0].mxu0
      %632 = vmatprep.mubr.bf16.mxu0 0
      %633 = vmatmul.mubr.bf16.gmra.mrb[0].mxu0 %v518
      %v634 = vpop.f32.mrb[0].mxu0
      %v635 = vadd.f32 %v401, %v634
      %v636 = vpop.f32.mrb[0].mxu0
      %v637 = vpop.f32.mrb[0].mxu0
      %v638 = vadd.f32 %v401, %v637
      %v639 = vpop.f32.mrb[0].mxu0
      %640 = vmatprep.mubr.bf16.mxu0 0
      %641 = vmatmul.mubr.bf16.gmra.mrb[0].mxu0 %v521
      %v642 = vpop.f32.mrb[0].mxu0
      %v643 = vadd.f32 %v401, %v642
      %v644 = vpop.f32.mrb[0].mxu0
      %v645 = vpop.f32.mrb[0].mxu0
      %v646 = vadd.f32 %v401, %v645
      %v647 = vpop.f32.mrb[0].mxu0
      %648 = vmatprep.mubr.bf16.mxu0 0
      %649 = vmatmul.mubr.bf16.gmra.mrb[0].mxu0 %v524
      %v650 = vpop.f32.mrb[0].mxu0
      %v651 = vadd.f32 %v401, %v650
      %v652 = vpop.f32.mrb[0].mxu0
      %v653 = vpop.f32.mrb[0].mxu0
      %v654 = vadd.f32 %v401, %v653
      %v655 = vpop.f32.mrb[0].mxu0
      %656 = vmatprep.mubr.bf16.mxu0 0
      %657 = vmatmul.mubr.bf16.gmra.mrb[0].mxu0 %v527
      %v658 = vpop.f32.mrb[0].mxu0
      %v659 = vadd.f32 %v401, %v658
      %v660 = vpop.f32.mrb[0].mxu0
      %v661 = vpop.f32.mrb[0].mxu0
      %v662 = vadd.f32 %v401, %v661
      %v663 = vpop.f32.mrb[0].mxu0
      %664 = vmatprep.mubr.bf16.mxu0 0
      %665 = vmatmul.mubr.bf16.gmra.mrb[0].mxu0 %v530
      %v666 = vpop.f32.mrb[0].mxu0
      %v667 = vadd.f32 %v401, %v666
      %v668 = vpop.f32.mrb[0].mxu0
      %v669 = vpop.f32.mrb[0].mxu0
      %v670 = vadd.f32 %v401, %v669
      %v671 = vpop.f32.mrb[0].mxu0
      %672 = vmatprep.mubr.bf16.mxu0 0
      %673 = vmatmul.mubr.bf16.gmra.mrb[0].mxu0 %v533
      %v674 = vpop.f32.mrb[0].mxu0
      %v675 = vadd.f32 %v401, %v674
      %v676 = vpop.f32.mrb[0].mxu0
      %v677 = vpop.f32.mrb[0].mxu0
      %v678 = vadd.f32 %v401, %v677
      %v679 = vpop.f32.mrb[0].mxu0
      %680 = vmatprep.mubr.bf16.mxu0 0
      %681 = vmatmul.mubr.bf16.gmra.mrb[0].mxu0 %v536
      %v682 = vpop.f32.mrb[0].mxu0
      %v683 = vadd.f32 %v401, %v682
      %v684 = vpop.f32.mrb[0].mxu0
      %v685 = vpop.f32.mrb[0].mxu0
      %v686 = vadd.f32 %v401, %v685
      %v687 = vpop.f32.mrb[0].mxu0
      %688 = vmatprep.mubr.bf16.mxu0 0
      %689 = vmatmul.mubr.bf16.gmra.mrb[0].mxu0 %v539
      %v690 = vpop.f32.mrb[0].mxu0
      %v691 = vadd.f32 %v401, %v690
      %v692 = vpop.f32.mrb[0].mxu0
      %v693 = vpop.f32.mrb[0].mxu0
      %v694 = vadd.f32 %v401, %v693
      %v695 = vpop.f32.mrb[0].mxu0
      %696 = vmatprep.mubr.bf16.mxu0 0
      %697 = vmatmul.mubr.bf16.gmra.mrb[0].mxu0 %v542
      %v698 = vpop.f32.mrb[0].mxu0
      %v699 = vadd.f32 %v401, %v698
      %v700 = vpop.f32.mrb[0].mxu0
      %v701 = vpop.f32.mrb[0].mxu0
      %v702 = vadd.f32 %v401, %v701
      %v703 = vpop.f32.mrb[0].mxu0
      %704 = vdwg.mxu0
      %s705 = sadd.s32 %s23, %s24
      %s706 = smul.u32 %s705, 256
      %v707 = vlaneseq
      %v708 = vshrl.u32 %v707, 7
      %v709 = vadd.s32 %v708, 8
      %v710 = vadd.s32 %v708, 16
      %v711 = vadd.s32 %v708, 24
      %v712 = vadd.s32 %v708, 32
      %v713 = vadd.s32 %v708, 40
      %v714 = vadd.s32 %v708, 48
      %v715 = vadd.s32 %v708, 56
      %v716 = vadd.s32 %v708, 64
      %v717 = vadd.s32 %v708, 72
      %v718 = vadd.s32 %v708, 80
      %v719 = vadd.s32 %v708, 88
      %v720 = vadd.s32 %v708, 96
      %v721 = vadd.s32 %v708, 104
      %v722 = vadd.s32 %v708, 112
      %v723 = vadd.s32 %v708, 120
      %v724 = vadd.s32 %v708, 128
      %v725 = vadd.s32 %v708, 136
      %v726 = vadd.s32 %v708, 144
      %v727 = vadd.s32 %v708, 152
      %v728 = vadd.s32 %v708, 160
      %v729 = vadd.s32 %v708, 168
      %v730 = vadd.s32 %v708, 176
      %v731 = vadd.s32 %v708, 184
      %v732 = vadd.s32 %v708, 192
      %v733 = vadd.s32 %v708, 200
      %v734 = vadd.s32 %v708, 208
      %v735 = vadd.s32 %v708, 216
      %v736 = vadd.s32 %v708, 224
      %v737 = vadd.s32 %v708, 232
      %v738 = vadd.s32 %v708, 240
      %v739 = vadd.s32 %v708, 248
      %v740 = vstv %s706
      %v741 = vadd.s32 %v740, %v708
      %v742 = vadd.s32 %v740, %v709
      %v743 = vadd.s32 %v740, %v710
      %v744 = vadd.s32 %v740, %v711
      %v745 = vadd.s32 %v740, %v712
      %v746 = vadd.s32 %v740, %v713
      %v747 = vadd.s32 %v740, %v714
      %v748 = vadd.s32 %v740, %v715
      %v749 = vadd.s32 %v740, %v716
      %v750 = vadd.s32 %v740, %v717
      %v751 = vadd.s32 %v740, %v718
      %v752 = vadd.s32 %v740, %v719
      %v753 = vadd.s32 %v740, %v720
      %v754 = vadd.s32 %v740, %v721
      %v755 = vadd.s32 %v740, %v722
      %v756 = vadd.s32 %v740, %v723
      %v757 = vadd.s32 %v740, %v724
      %v758 = vadd.s32 %v740, %v725
      %v759 = vadd.s32 %v740, %v726
      %v760 = vadd.s32 %v740, %v727
      %v761 = vadd.s32 %v740, %v728
      %v762 = vadd.s32 %v740, %v729
      %v763 = vadd.s32 %v740, %v730
      %v764 = vadd.s32 %v740, %v731
      %v765 = vadd.s32 %v740, %v732
      %v766 = vadd.s32 %v740, %v733
      %v767 = vadd.s32 %v740, %v734
      %v768 = vadd.s32 %v740, %v735
      %v769 = vadd.s32 %v740, %v736
      %v770 = vadd.s32 %v740, %v737
      %v771 = vadd.s32 %v740, %v738
      %v772 = vadd.s32 %v740, %v739
      %vm773 = vcmp.lt.s32.totalorder %v741, 16
      %vm774 = vcmp.lt.s32.totalorder %v742, 16
      %vm775 = vcmp.lt.s32.totalorder %v743, 16
      %vm776 = vcmp.lt.s32.totalorder %v744, 16
      %vm777 = vcmp.lt.s32.totalorder %v745, 16
      %vm778 = vcmp.lt.s32.totalorder %v746, 16
      %vm779 = vcmp.lt.s32.totalorder %v747, 16
      %vm780 = vcmp.lt.s32.totalorder %v748, 16
      %vm781 = vcmp.lt.s32.totalorder %v749, 16
      %vm782 = vcmp.lt.s32.totalorder %v750, 16
      %vm783 = vcmp.lt.s32.totalorder %v751, 16
      %vm784 = vcmp.lt.s32.totalorder %v752, 16
      %vm785 = vcmp.lt.s32.totalorder %v753, 16
      %vm786 = vcmp.lt.s32.totalorder %v754, 16
      %vm787 = vcmp.lt.s32.totalorder %v755, 16
      %vm788 = vcmp.lt.s32.totalorder %v756, 16
      %vm789 = vcmp.lt.s32.totalorder %v757, 16
      %vm790 = vcmp.lt.s32.totalorder %v758, 16
      %vm791 = vcmp.lt.s32.totalorder %v759, 16
      %vm792 = vcmp.lt.s32.totalorder %v760, 16
      %vm793 = vcmp.lt.s32.totalorder %v761, 16
      %vm794 = vcmp.lt.s32.totalorder %v762, 16
      %vm795 = vcmp.lt.s32.totalorder %v763, 16
      %vm796 = vcmp.lt.s32.totalorder %v764, 16
      %vm797 = vcmp.lt.s32.totalorder %v765, 16
      %vm798 = vcmp.lt.s32.totalorder %v766, 16
      %vm799 = vcmp.lt.s32.totalorder %v767, 16
      %vm800 = vcmp.lt.s32.totalorder %v768, 16
      %vm801 = vcmp.lt.s32.totalorder %v769, 16
      %vm802 = vcmp.lt.s32.totalorder %v770, 16
      %vm803 = vcmp.lt.s32.totalorder %v771, 16
      %vm804 = vcmp.lt.s32.totalorder %v772, 16
      %v805 = vsel %vm495, %v579, -inf
      %806 = vmax.xlane.f32.xlu0 %v805
      %v807 = vpop.xlane.xlu0 %806
      %v808 = vsel %vm495, %v582, -inf
      %809 = vmax.xlane.f32.xlu0 %v808
      %v810 = vpop.xlane.xlu0 %809
      %v811 = vsel %vm495, %v587, -inf
      %812 = vmax.xlane.f32.xlu0 %v811
      %v813 = vpop.xlane.xlu0 %812
      %v814 = vsel %vm495, %v590, -inf
      %815 = vmax.xlane.f32.xlu0 %v814
      %v816 = vpop.xlane.xlu0 %815
      %v817 = vsel %vm495, %v595, -inf
      %818 = vmax.xlane.f32.xlu0 %v817
      %v819 = vpop.xlane.xlu0 %818
      %v820 = vsel %vm495, %v598, -inf
      %821 = vmax.xlane.f32.xlu0 %v820
      %v822 = vpop.xlane.xlu0 %821
      %v823 = vsel %vm495, %v603, -inf
      %824 = vmax.xlane.f32.xlu0 %v823
      %v825 = vpop.xlane.xlu0 %824
      %v826 = vsel %vm495, %v606, -inf
      %827 = vmax.xlane.f32.xlu0 %v826
      %v828 = vpop.xlane.xlu0 %827
      %v829 = vsel %vm495, %v611, -inf
      %830 = vmax.xlane.f32.xlu0 %v829
      %v831 = vpop.xlane.xlu0 %830
      %v832 = vsel %vm495, %v614, -inf
      %833 = vmax.xlane.f32.xlu0 %v832
      %v834 = vpop.xlane.xlu0 %833
      %v835 = vsel %vm495, %v619, -inf
      %836 = vmax.xlane.f32.xlu0 %v835
      %v837 = vpop.xlane.xlu0 %836
      %v838 = vsel %vm495, %v622, -inf
      %839 = vmax.xlane.f32.xlu0 %v838
      %v840 = vpop.xlane.xlu0 %839
      %v841 = vsel %vm495, %v627, -inf
      %842 = vmax.xlane.f32.xlu0 %v841
      %v843 = vpop.xlane.xlu0 %842
      %v844 = vsel %vm495, %v630, -inf
      %845 = vmax.xlane.f32.xlu0 %v844
      %v846 = vpop.xlane.xlu0 %845
      %v847 = vsel %vm495, %v635, -inf
      %848 = vmax.xlane.f32.xlu0 %v847
      %v849 = vpop.xlane.xlu0 %848
      %v850 = vsel %vm495, %v638, -inf
      %851 = vmax.xlane.f32.xlu0 %v850
      %v852 = vpop.xlane.xlu0 %851
      %v853 = vsel %vm495, %v643, -inf
      %854 = vmax.xlane.f32.xlu0 %v853
      %v855 = vpop.xlane.xlu0 %854
      %v856 = vsel %vm495, %v646, -inf
      %857 = vmax.xlane.f32.xlu0 %v856
      %v858 = vpop.xlane.xlu0 %857
      %v859 = vsel %vm495, %v651, -inf
      %860 = vmax.xlane.f32.xlu0 %v859
      %v861 = vpop.xlane.xlu0 %860
      %v862 = vsel %vm495, %v654, -inf
      %863 = vmax.xlane.f32.xlu0 %v862
      %v864 = vpop.xlane.xlu0 %863
      %v865 = vsel %vm495, %v659, -inf
      %866 = vmax.xlane.f32.xlu0 %v865
      %v867 = vpop.xlane.xlu0 %866
      %v868 = vsel %vm495, %v662, -inf
      %869 = vmax.xlane.f32.xlu0 %v868
      %v870 = vpop.xlane.xlu0 %869
      %v871 = vsel %vm495, %v667, -inf
      %872 = vmax.xlane.f32.xlu0 %v871
      %v873 = vpop.xlane.xlu0 %872
      %v874 = vsel %vm495, %v670, -inf
      %875 = vmax.xlane.f32.xlu0 %v874
      %v876 = vpop.xlane.xlu0 %875
      %v877 = vsel %vm495, %v675, -inf
      %878 = vmax.xlane.f32.xlu0 %v877
      %v879 = vpop.xlane.xlu0 %878
      %v880 = vsel %vm495, %v678, -inf
      %881 = vmax.xlane.f32.xlu0 %v880
      %v882 = vpop.xlane.xlu0 %881
      %v883 = vsel %vm495, %v683, -inf
      %884 = vmax.xlane.f32.xlu0 %v883
      %v885 = vpop.xlane.xlu0 %884
      %v886 = vsel %vm495, %v686, -inf
      %887 = vmax.xlane.f32.xlu0 %v886
      %v888 = vpop.xlane.xlu0 %887
      %v889 = vsel %vm495, %v691, -inf
      %890 = vmax.xlane.f32.xlu0 %v889
      %v891 = vpop.xlane.xlu0 %890
      %v892 = vsel %vm495, %v694, -inf
      %893 = vmax.xlane.f32.xlu0 %v892
      %v894 = vpop.xlane.xlu0 %893
      %v895 = vsel %vm495, %v699, -inf
      %896 = vmax.xlane.f32.xlu0 %v895
      %v897 = vpop.xlane.xlu0 %896
      %v898 = vsel %vm495, %v702, -inf
      %899 = vmax.xlane.f32.xlu0 %v898
      %v900 = vpop.xlane.xlu0 %899
      %v901 = vsub.f32 %v579, %v807
      %v902 = vsub.f32 %v582, %v810
      %v903 = vsub.f32 %v587, %v813
      %v904 = vsub.f32 %v590, %v816
      %v905 = vsub.f32 %v595, %v819
      %v906 = vsub.f32 %v598, %v822
      %v907 = vsub.f32 %v603, %v825
      %v908 = vsub.f32 %v606, %v828
      %v909 = vsub.f32 %v611, %v831
      %v910 = vsub.f32 %v614, %v834
      %v911 = vsub.f32 %v619, %v837
      %v912 = vsub.f32 %v622, %v840
      %v913 = vsub.f32 %v627, %v843
      %v914 = vsub.f32 %v630, %v846
      %v915 = vsub.f32 %v635, %v849
      %v916 = vsub.f32 %v638, %v852
      %v917 = vsub.f32 %v643, %v855
      %v918 = vsub.f32 %v646, %v858
      %v919 = vsub.f32 %v651, %v861
      %v920 = vsub.f32 %v654, %v864
      %v921 = vsub.f32 %v659, %v867
      %v922 = vsub.f32 %v662, %v870
      %v923 = vsub.f32 %v667, %v873
      %v924 = vsub.f32 %v670, %v876
      %v925 = vsub.f32 %v675, %v879
      %v926 = vsub.f32 %v678, %v882
      %v927 = vsub.f32 %v683, %v885
      %v928 = vsub.f32 %v686, %v888
      %v929 = vsub.f32 %v691, %v891
      %v930 = vsub.f32 %v694, %v894
      %v931 = vsub.f32 %v699, %v897
      %v932 = vsub.f32 %v702, %v900
      %v933 = vmul.f32 %v901, 1.442695
      %v934 = vpow.pop %v933
      %v935 = vmul.f32 %v902, 1.442695
      %v936 = vpow.pop %v935
      %v937 = vmul.f32 %v903, 1.442695
      %v938 = vpow.pop %v937
      %v939 = vmul.f32 %v904, 1.442695
      %v940 = vpow.pop %v939
      %v941 = vmul.f32 %v905, 1.442695
      %v942 = vpow.pop %v941
      %v943 = vmul.f32 %v906, 1.442695
      %v944 = vpow.pop %v943
      %v945 = vmul.f32 %v907, 1.442695
      %v946 = vpow.pop %v945
      %v947 = vmul.f32 %v908, 1.442695
      %v948 = vpow.pop %v947
      %v949 = vmul.f32 %v909, 1.442695
      %v950 = vpow.pop %v949
      %v951 = vmul.f32 %v910, 1.442695
      %v952 = vpow.pop %v951
      %v953 = vmul.f32 %v911, 1.442695
      %v954 = vpow.pop %v953
      %v955 = vmul.f32 %v912, 1.442695
      %v956 = vpow.pop %v955
      %v957 = vmul.f32 %v913, 1.442695
      %v958 = vpow.pop %v957
      %v959 = vmul.f32 %v914, 1.442695
      %v960 = vpow.pop %v959
      %v961 = vmul.f32 %v915, 1.442695
      %v962 = vpow.pop %v961
      %v963 = vmul.f32 %v916, 1.442695
      %v964 = vpow.pop %v963
      %v965 = vmul.f32 %v917, 1.442695
      %v966 = vpow.pop %v965
      %v967 = vmul.f32 %v918, 1.442695
      %v968 = vpow.pop %v967
      %v969 = vmul.f32 %v919, 1.442695
      %v970 = vpow.pop %v969
      %v971 = vmul.f32 %v920, 1.442695
      %v972 = vpow.pop %v971
      %v973 = vmul.f32 %v921, 1.442695
      %v974 = vpow.pop %v973
      %v975 = vmul.f32 %v922, 1.442695
      %v976 = vpow.pop %v975
      %v977 = vmul.f32 %v923, 1.442695
      %v978 = vpow.pop %v977
      %v979 = vmul.f32 %v924, 1.442695
      %v980 = vpow.pop %v979
      %v981 = vmul.f32 %v925, 1.442695
      %v982 = vpow.pop %v981
      %v983 = vmul.f32 %v926, 1.442695
      %v984 = vpow.pop %v983
      %v985 = vmul.f32 %v927, 1.442695
      %v986 = vpow.pop %v985
      %v987 = vmul.f32 %v928, 1.442695
      %v988 = vpow.pop %v987
      %v989 = vmul.f32 %v929, 1.442695
      %v990 = vpow.pop %v989
      %v991 = vmul.f32 %v930, 1.442695
      %v992 = vpow.pop %v991
      %v993 = vmul.f32 %v931, 1.442695
      %v994 = vpow.pop %v993
      %v995 = vmul.f32 %v932, 1.442695
      %v996 = vpow.pop %v995
      %v997 = vsel %vm495, %v934, 0.0
      %998 = vadd.xlane.f32.xlu0 %v997
      %v999 = vpop.xlane.xlu0 %998
      %v1000 = vsel %vm495, %v936, 0.0
      %1001 = vadd.xlane.f32.xlu0 %v1000
      %v1002 = vpop.xlane.xlu0 %1001
      %v1003 = vsel %vm495, %v938, 0.0
      %1004 = vadd.xlane.f32.xlu0 %v1003
      %v1005 = vpop.xlane.xlu0 %1004
      %v1006 = vsel %vm495, %v940, 0.0
      %1007 = vadd.xlane.f32.xlu0 %v1006
      %v1008 = vpop.xlane.xlu0 %1007
      %v1009 = vsel %vm495, %v942, 0.0
      %1010 = vadd.xlane.f32.xlu0 %v1009
      %v1011 = vpop.xlane.xlu0 %1010
      %v1012 = vsel %vm495, %v944, 0.0
      %1013 = vadd.xlane.f32.xlu0 %v1012
      %v1014 = vpop.xlane.xlu0 %1013
      %v1015 = vsel %vm495, %v946, 0.0
      %1016 = vadd.xlane.f32.xlu0 %v1015
      %v1017 = vpop.xlane.xlu0 %1016
      %v1018 = vsel %vm495, %v948, 0.0
      %1019 = vadd.xlane.f32.xlu0 %v1018
      %v1020 = vpop.xlane.xlu0 %1019
      %v1021 = vsel %vm495, %v950, 0.0
      %1022 = vadd.xlane.f32.xlu0 %v1021
      %v1023 = vpop.xlane.xlu0 %1022
      %v1024 = vsel %vm495, %v952, 0.0
      %1025 = vadd.xlane.f32.xlu0 %v1024
      %v1026 = vpop.xlane.xlu0 %1025
      %v1027 = vsel %vm495, %v954, 0.0
      %1028 = vadd.xlane.f32.xlu0 %v1027
      %v1029 = vpop.xlane.xlu0 %1028
      %v1030 = vsel %vm495, %v956, 0.0
      %1031 = vadd.xlane.f32.xlu0 %v1030
      %v1032 = vpop.xlane.xlu0 %1031
      %v1033 = vsel %vm495, %v958, 0.0
      %1034 = vadd.xlane.f32.xlu0 %v1033
      %v1035 = vpop.xlane.xlu0 %1034
      %v1036 = vsel %vm495, %v960, 0.0
      %1037 = vadd.xlane.f32.xlu0 %v1036
      %v1038 = vpop.xlane.xlu0 %1037
      %v1039 = vsel %vm495, %v962, 0.0
      %1040 = vadd.xlane.f32.xlu0 %v1039
      %v1041 = vpop.xlane.xlu0 %1040
      %v1042 = vsel %vm495, %v964, 0.0
      %1043 = vadd.xlane.f32.xlu0 %v1042
      %v1044 = vpop.xlane.xlu0 %1043
      %v1045 = vsel %vm495, %v966, 0.0
      %1046 = vadd.xlane.f32.xlu0 %v1045
      %v1047 = vpop.xlane.xlu0 %1046
      %v1048 = vsel %vm495, %v968, 0.0
      %1049 = vadd.xlane.f32.xlu0 %v1048
      %v1050 = vpop.xlane.xlu0 %1049
      %v1051 = vsel %vm495, %v970, 0.0
      %1052 = vadd.xlane.f32.xlu0 %v1051
      %v1053 = vpop.xlane.xlu0 %1052
      %v1054 = vsel %vm495, %v972, 0.0
      %1055 = vadd.xlane.f32.xlu0 %v1054
      %v1056 = vpop.xlane.xlu0 %1055
      %v1057 = vsel %vm495, %v974, 0.0
      %1058 = vadd.xlane.f32.xlu0 %v1057
      %v1059 = vpop.xlane.xlu0 %1058
      %v1060 = vsel %vm495, %v976, 0.0
      %1061 = vadd.xlane.f32.xlu0 %v1060
      %v1062 = vpop.xlane.xlu0 %1061
      %v1063 = vsel %vm495, %v978, 0.0
      %1064 = vadd.xlane.f32.xlu0 %v1063
      %v1065 = vpop.xlane.xlu0 %1064
      %v1066 = vsel %vm495, %v980, 0.0
      %1067 = vadd.xlane.f32.xlu0 %v1066
      %v1068 = vpop.xlane.xlu0 %1067
      %v1069 = vsel %vm495, %v982, 0.0
      %1070 = vadd.xlane.f32.xlu0 %v1069
      %v1071 = vpop.xlane.xlu0 %1070
      %v1072 = vsel %vm495, %v984, 0.0
      %1073 = vadd.xlane.f32.xlu0 %v1072
      %v1074 = vpop.xlane.xlu0 %1073
      %v1075 = vsel %vm495, %v986, 0.0
      %1076 = vadd.xlane.f32.xlu0 %v1075
      %v1077 = vpop.xlane.xlu0 %1076
      %v1078 = vsel %vm495, %v988, 0.0
      %1079 = vadd.xlane.f32.xlu0 %v1078
      %v1080 = vpop.xlane.xlu0 %1079
      %v1081 = vsel %vm495, %v990, 0.0
      %1082 = vadd.xlane.f32.xlu0 %v1081
      %v1083 = vpop.xlane.xlu0 %1082
      %v1084 = vsel %vm495, %v992, 0.0
      %1085 = vadd.xlane.f32.xlu0 %v1084
      %v1086 = vpop.xlane.xlu0 %1085
      %v1087 = vsel %vm495, %v994, 0.0
      %1088 = vadd.xlane.f32.xlu0 %v1087
      %v1089 = vpop.xlane.xlu0 %1088
      %v1090 = vsel %vm495, %v996, 0.0
      %1091 = vadd.xlane.f32.xlu0 %v1090
      %v1092 = vpop.xlane.xlu0 %1091
      %v1093 = vlog2.pop %v999
      %v1094 = vmul.f32 %v1093, 0.6931472
      %v1095 = vlog2.pop %v1002
      %v1096 = vmul.f32 %v1095, 0.6931472
      %v1097 = vlog2.pop %v1005
      %v1098 = vmul.f32 %v1097, 0.6931472
      %v1099 = vlog2.pop %v1008
      %v1100 = vmul.f32 %v1099, 0.6931472
      %v1101 = vlog2.pop %v1011
      %v1102 = vmul.f32 %v1101, 0.6931472
      %v1103 = vlog2.pop %v1014
      %v1104 = vmul.f32 %v1103, 0.6931472
      %v1105 = vlog2.pop %v1017
      %v1106 = vmul.f32 %v1105, 0.6931472
      %v1107 = vlog2.pop %v1020
      %v1108 = vmul.f32 %v1107, 0.6931472
      %v1109 = vlog2.pop %v1023
      %v1110 = vmul.f32 %v1109, 0.6931472
      %v1111 = vlog2.pop %v1026
      %v1112 = vmul.f32 %v1111, 0.6931472
      %v1113 = vlog2.pop %v1029
      %v1114 = vmul.f32 %v1113, 0.6931472
      %v1115 = vlog2.pop %v1032
      %v1116 = vmul.f32 %v1115, 0.6931472
      %v1117 = vlog2.pop %v1035
      %v1118 = vmul.f32 %v1117, 0.6931472
      %v1119 = vlog2.pop %v1038
      %v1120 = vmul.f32 %v1119, 0.6931472
      %v1121 = vlog2.pop %v1041
      %v1122 = vmul.f32 %v1121, 0.6931472
      %v1123 = vlog2.pop %v1044
      %v1124 = vmul.f32 %v1123, 0.6931472
      %v1125 = vlog2.pop %v1047
      %v1126 = vmul.f32 %v1125, 0.6931472
      %v1127 = vlog2.pop %v1050
      %v1128 = vmul.f32 %v1127, 0.6931472
      %v1129 = vlog2.pop %v1053
      %v1130 = vmul.f32 %v1129, 0.6931472
      %v1131 = vlog2.pop %v1056
      %v1132 = vmul.f32 %v1131, 0.6931472
      %v1133 = vlog2.pop %v1059
      %v1134 = vmul.f32 %v1133, 0.6931472
      %v1135 = vlog2.pop %v1062
      %v1136 = vmul.f32 %v1135, 0.6931472
      %v1137 = vlog2.pop %v1065
      %v1138 = vmul.f32 %v1137, 0.6931472
      %v1139 = vlog2.pop %v1068
      %v1140 = vmul.f32 %v1139, 0.6931472
      %v1141 = vlog2.pop %v1071
      %v1142 = vmul.f32 %v1141, 0.6931472
      %v1143 = vlog2.pop %v1074
      %v1144 = vmul.f32 %v1143, 0.6931472
      %v1145 = vlog2.pop %v1077
      %v1146 = vmul.f32 %v1145, 0.6931472
      %v1147 = vlog2.pop %v1080
      %v1148 = vmul.f32 %v1147, 0.6931472
      %v1149 = vlog2.pop %v1083
      %v1150 = vmul.f32 %v1149, 0.6931472
      %v1151 = vlog2.pop %v1086
      %v1152 = vmul.f32 %v1151, 0.6931472
      %v1153 = vlog2.pop %v1089
      %v1154 = vmul.f32 %v1153, 0.6931472
      %v1155 = vlog2.pop %v1092
      %v1156 = vmul.f32 %v1155, 0.6931472
      %v1157 = vadd.f32 %v807, %v1094
      %v1158 = vadd.f32 %v810, %v1096
      %v1159 = vadd.f32 %v813, %v1098
      %v1160 = vadd.f32 %v816, %v1100
      %v1161 = vadd.f32 %v819, %v1102
      %v1162 = vadd.f32 %v822, %v1104
      %v1163 = vadd.f32 %v825, %v1106
      %v1164 = vadd.f32 %v828, %v1108
      %v1165 = vadd.f32 %v831, %v1110
      %v1166 = vadd.f32 %v834, %v1112
      %v1167 = vadd.f32 %v837, %v1114
      %v1168 = vadd.f32 %v840, %v1116
      %v1169 = vadd.f32 %v843, %v1118
      %v1170 = vadd.f32 %v846, %v1120
      %v1171 = vadd.f32 %v849, %v1122
      %v1172 = vadd.f32 %v852, %v1124
      %v1173 = vadd.f32 %v855, %v1126
      %v1174 = vadd.f32 %v858, %v1128
      %v1175 = vadd.f32 %v861, %v1130
      %v1176 = vadd.f32 %v864, %v1132
      %v1177 = vadd.f32 %v867, %v1134
      %v1178 = vadd.f32 %v870, %v1136
      %v1179 = vadd.f32 %v873, %v1138
      %v1180 = vadd.f32 %v876, %v1140
      %v1181 = vadd.f32 %v879, %v1142
      %v1182 = vadd.f32 %v882, %v1144
      %v1183 = vadd.f32 %v885, %v1146
      %v1184 = vadd.f32 %v888, %v1148
      %v1185 = vadd.f32 %v891, %v1150
      %v1186 = vadd.f32 %v894, %v1152
      %v1187 = vadd.f32 %v897, %v1154
      %v1188 = vadd.f32 %v900, %v1156
      %v1189 = vsel %vm773, %v1157, 0.0
      %v1190 = vsel %vm774, %v1158, 0.0
      %v1191 = vsel %vm775, %v1159, 0.0
      %v1192 = vsel %vm776, %v1160, 0.0
      %v1193 = vsel %vm777, %v1161, 0.0
      %v1194 = vsel %vm778, %v1162, 0.0
      %v1195 = vsel %vm779, %v1163, 0.0
      %v1196 = vsel %vm780, %v1164, 0.0
      %v1197 = vsel %vm781, %v1165, 0.0
      %v1198 = vsel %vm782, %v1166, 0.0
      %v1199 = vsel %vm783, %v1167, 0.0
      %v1200 = vsel %vm784, %v1168, 0.0
      %v1201 = vsel %vm785, %v1169, 0.0
      %v1202 = vsel %vm786, %v1170, 0.0
      %v1203 = vsel %vm787, %v1171, 0.0
      %v1204 = vsel %vm788, %v1172, 0.0
      %v1205 = vsel %vm789, %v1173, 0.0
      %v1206 = vsel %vm790, %v1174, 0.0
      %v1207 = vsel %vm791, %v1175, 0.0
      %v1208 = vsel %vm792, %v1176, 0.0
      %v1209 = vsel %vm793, %v1177, 0.0
      %v1210 = vsel %vm794, %v1178, 0.0
      %v1211 = vsel %vm795, %v1179, 0.0
      %v1212 = vsel %vm796, %v1180, 0.0
      %v1213 = vsel %vm797, %v1181, 0.0
      %v1214 = vsel %vm798, %v1182, 0.0
      %v1215 = vsel %vm799, %v1183, 0.0
      %v1216 = vsel %vm800, %v1184, 0.0
      %v1217 = vsel %vm801, %v1185, 0.0
      %v1218 = vsel %vm802, %v1186, 0.0
      %v1219 = vsel %vm803, %v1187, 0.0
      %v1220 = vsel %vm804, %v1188, 0.0
      %v1221 = vld [vmem:[%s340] sm:$0x1]
      %vm1222 = vcmask 7168
      %v1223 = vsel %vm1222, %v1189, 0.0
      %v1224 = vsel %vm1222, %v1190, 0.0
      %v1225 = vadd.f32 %v1223, %v1224
      %v1226 = vsel %vm1222, %v1191, 0.0
      %v1227 = vadd.f32 %v1225, %v1226
      %v1228 = vsel %vm1222, %v1192, 0.0
      %v1229 = vadd.f32 %v1227, %v1228
      %v1230 = vsel %vm1222, %v1193, 0.0
      %v1231 = vadd.f32 %v1229, %v1230
      %v1232 = vsel %vm1222, %v1194, 0.0
      %v1233 = vadd.f32 %v1231, %v1232
      %v1234 = vsel %vm1222, %v1195, 0.0
      %v1235 = vadd.f32 %v1233, %v1234
      %v1236 = vsel %vm1222, %v1196, 0.0
      %v1237 = vadd.f32 %v1235, %v1236
      %v1238 = vsel %vm1222, %v1197, 0.0
      %v1239 = vadd.f32 %v1237, %v1238
      %v1240 = vsel %vm1222, %v1198, 0.0
      %v1241 = vadd.f32 %v1239, %v1240
      %v1242 = vsel %vm1222, %v1199, 0.0
      %v1243 = vadd.f32 %v1241, %v1242
      %v1244 = vsel %vm1222, %v1200, 0.0
      %v1245 = vadd.f32 %v1243, %v1244
      %v1246 = vsel %vm1222, %v1201, 0.0
      %v1247 = vadd.f32 %v1245, %v1246
      %v1248 = vsel %vm1222, %v1202, 0.0
      %v1249 = vadd.f32 %v1247, %v1248
      %v1250 = vsel %vm1222, %v1203, 0.0
      %v1251 = vadd.f32 %v1249, %v1250
      %v1252 = vsel %vm1222, %v1204, 0.0
      %v1253 = vadd.f32 %v1251, %v1252
      %v1254 = vsel %vm1222, %v1205, 0.0
      %v1255 = vadd.f32 %v1253, %v1254
      %v1256 = vsel %vm1222, %v1206, 0.0
      %v1257 = vadd.f32 %v1255, %v1256
      %v1258 = vsel %vm1222, %v1207, 0.0
      %v1259 = vadd.f32 %v1257, %v1258
      %v1260 = vsel %vm1222, %v1208, 0.0
      %v1261 = vadd.f32 %v1259, %v1260
      %v1262 = vsel %vm1222, %v1209, 0.0
      %v1263 = vadd.f32 %v1261, %v1262
      %v1264 = vsel %vm1222, %v1210, 0.0
      %v1265 = vadd.f32 %v1263, %v1264
      %v1266 = vsel %vm1222, %v1211, 0.0
      %v1267 = vadd.f32 %v1265, %v1266
      %v1268 = vsel %vm1222, %v1212, 0.0
      %v1269 = vadd.f32 %v1267, %v1268
      %v1270 = vsel %vm1222, %v1213, 0.0
      %v1271 = vadd.f32 %v1269, %v1270
      %v1272 = vsel %vm1222, %v1214, 0.0
      %v1273 = vadd.f32 %v1271, %v1272
      %v1274 = vsel %vm1222, %v1215, 0.0
      %v1275 = vadd.f32 %v1273, %v1274
      %v1276 = vsel %vm1222, %v1216, 0.0
      %v1277 = vadd.f32 %v1275, %v1276
      %v1278 = vsel %vm1222, %v1217, 0.0
      %v1279 = vadd.f32 %v1277, %v1278
      %v1280 = vsel %vm1222, %v1218, 0.0
      %v1281 = vadd.f32 %v1279, %v1280
      %v1282 = vsel %vm1222, %v1219, 0.0
      %v1283 = vadd.f32 %v1281, %v1282
      %v1284 = vsel %vm1222, %v1220, 0.0
      %v1285 = vadd.f32 %v1283, %v1284
      %1286 = vadd.xlane.f32.xlu0 %v1285
      %v1287 = vpop.xlane.xlu0 %1286
      %v1288 = vrot.slane %v1287, 4
      %v1289 = vadd.f32 %v1287, %v1288
      %v1290 = vrot.slane %v1289, 2
      %v1291 = vadd.f32 %v1289, %v1290
      %v1292 = vrot.slane %v1291, 1
      %v1293 = vadd.f32 %v1291, %v1292
      %s1294 = vtos %v1293
      %v1295 = vstv %s1294
      %v1296 = vsub.f32 0.0, %v1295
      %v1297 = vadd.f32 %v1221, %v1296
      %vm1298 = vcmask 0
      %1299 = vst.msk [vmem:[%s340] sm:$0x1] %vm1298, %v1297
      %vm1300 = vcmask 523520
      %v1301 = vsel %vm1300, %v579, -inf
      %1302 = vmax.xlane.f32.xlu0 %v1301
      %v1303 = vpop.xlane.xlu0 %1302
      %v1304 = vsel %vm1300, %v582, -inf
      %1305 = vmax.xlane.f32.xlu0 %v1304
      %v1306 = vpop.xlane.xlu0 %1305
      %v1307 = vsel %vm1300, %v587, -inf
      %1308 = vmax.xlane.f32.xlu0 %v1307
      %v1309 = vpop.xlane.xlu0 %1308
      %v1310 = vsel %vm1300, %v590, -inf
      %1311 = vmax.xlane.f32.xlu0 %v1310
      %v1312 = vpop.xlane.xlu0 %1311
      %v1313 = vsel %vm1300, %v595, -inf
      %1314 = vmax.xlane.f32.xlu0 %v1313
      %v1315 = vpop.xlane.xlu0 %1314
      %v1316 = vsel %vm1300, %v598, -inf
      %1317 = vmax.xlane.f32.xlu0 %v1316
      %v1318 = vpop.xlane.xlu0 %1317
      %v1319 = vsel %vm1300, %v603, -inf
      %1320 = vmax.xlane.f32.xlu0 %v1319
      %v1321 = vpop.xlane.xlu0 %1320
      %v1322 = vsel %vm1300, %v606, -inf
      %1323 = vmax.xlane.f32.xlu0 %v1322
      %v1324 = vpop.xlane.xlu0 %1323
      %v1325 = vsel %vm1300, %v611, -inf
      %1326 = vmax.xlane.f32.xlu0 %v1325
      %v1327 = vpop.xlane.xlu0 %1326
      %v1328 = vsel %vm1300, %v614, -inf
      %1329 = vmax.xlane.f32.xlu0 %v1328
      %v1330 = vpop.xlane.xlu0 %1329
      %v1331 = vsel %vm1300, %v619, -inf
      %1332 = vmax.xlane.f32.xlu0 %v1331
      %v1333 = vpop.xlane.xlu0 %1332
      %v1334 = vsel %vm1300, %v622, -inf
      %1335 = vmax.xlane.f32.xlu0 %v1334
      %v1336 = vpop.xlane.xlu0 %1335
      %v1337 = vsel %vm1300, %v627, -inf
      %1338 = vmax.xlane.f32.xlu0 %v1337
      %v1339 = vpop.xlane.xlu0 %1338
      %v1340 = vsel %vm1300, %v630, -inf
      %1341 = vmax.xlane.f32.xlu0 %v1340
      %v1342 = vpop.xlane.xlu0 %1341
      %v1343 = vsel %vm1300, %v635, -inf
      %1344 = vmax.xlane.f32.xlu0 %v1343
      %v1345 = vpop.xlane.xlu0 %1344
      %v1346 = vsel %vm1300, %v638, -inf
      %1347 = vmax.xlane.f32.xlu0 %v1346
      %v1348 = vpop.xlane.xlu0 %1347
      %v1349 = vsel %vm1300, %v643, -inf
      %1350 = vmax.xlane.f32.xlu0 %v1349
      %v1351 = vpop.xlane.xlu0 %1350
      %v1352 = vsel %vm1300, %v646, -inf
      %1353 = vmax.xlane.f32.xlu0 %v1352
      %v1354 = vpop.xlane.xlu0 %1353
      %v1355 = vsel %vm1300, %v651, -inf
      %1356 = vmax.xlane.f32.xlu0 %v1355
      %v1357 = vpop.xlane.xlu0 %1356
      %v1358 = vsel %vm1300, %v654, -inf
      %1359 = vmax.xlane.f32.xlu0 %v1358
      %v1360 = vpop.xlane.xlu0 %1359
      %v1361 = vsel %vm1300, %v659, -inf
      %1362 = vmax.xlane.f32.xlu0 %v1361
      %v1363 = vpop.xlane.xlu0 %1362
      %v1364 = vsel %vm1300, %v662, -inf
      %1365 = vmax.xlane.f32.xlu0 %v1364
      %v1366 = vpop.xlane.xlu0 %1365
      %v1367 = vsel %vm1300, %v667, -inf
      %1368 = vmax.xlane.f32.xlu0 %v1367
      %v1369 = vpop.xlane.xlu0 %1368
      %v1370 = vsel %vm1300, %v670, -inf
      %1371 = vmax.xlane.f32.xlu0 %v1370
      %v1372 = vpop.xlane.xlu0 %1371
      %v1373 = vsel %vm1300, %v675, -inf
      %1374 = vmax.xlane.f32.xlu0 %v1373
      %v1375 = vpop.xlane.xlu0 %1374
      %v1376 = vsel %vm1300, %v678, -inf
      %1377 = vmax.xlane.f32.xlu0 %v1376
      %v1378 = vpop.xlane.xlu0 %1377
      %v1379 = vsel %vm1300, %v683, -inf
      %1380 = vmax.xlane.f32.xlu0 %v1379
      %v1381 = vpop.xlane.xlu0 %1380
      %v1382 = vsel %vm1300, %v686, -inf
      %1383 = vmax.xlane.f32.xlu0 %v1382
      %v1384 = vpop.xlane.xlu0 %1383
      %v1385 = vsel %vm1300, %v691, -inf
      %1386 = vmax.xlane.f32.xlu0 %v1385
      %v1387 = vpop.xlane.xlu0 %1386
      %v1388 = vsel %vm1300, %v694, -inf
      %1389 = vmax.xlane.f32.xlu0 %v1388
      %v1390 = vpop.xlane.xlu0 %1389
      %v1391 = vsel %vm1300, %v699, -inf
      %1392 = vmax.xlane.f32.xlu0 %v1391
      %v1393 = vpop.xlane.xlu0 %1392
      %v1394 = vsel %vm1300, %v702, -inf
      %1395 = vmax.xlane.f32.xlu0 %v1394
      %v1396 = vpop.xlane.xlu0 %1395
      %v1397 = vsub.f32 %v579, %v1303
      %v1398 = vsub.f32 %v582, %v1306
      %v1399 = vsub.f32 %v587, %v1309
      %v1400 = vsub.f32 %v590, %v1312
      %v1401 = vsub.f32 %v595, %v1315
      %v1402 = vsub.f32 %v598, %v1318
      %v1403 = vsub.f32 %v603, %v1321
      %v1404 = vsub.f32 %v606, %v1324
      %v1405 = vsub.f32 %v611, %v1327
      %v1406 = vsub.f32 %v614, %v1330
      %v1407 = vsub.f32 %v619, %v1333
      %v1408 = vsub.f32 %v622, %v1336
      %v1409 = vsub.f32 %v627, %v1339
      %v1410 = vsub.f32 %v630, %v1342
      %v1411 = vsub.f32 %v635, %v1345
      %v1412 = vsub.f32 %v638, %v1348
      %v1413 = vsub.f32 %v643, %v1351
      %v1414 = vsub.f32 %v646, %v1354
      %v1415 = vsub.f32 %v651, %v1357
      %v1416 = vsub.f32 %v654, %v1360
      %v1417 = vsub.f32 %v659, %v1363
      %v1418 = vsub.f32 %v662, %v1366
      %v1419 = vsub.f32 %v667, %v1369
      %v1420 = vsub.f32 %v670, %v1372
      %v1421 = vsub.f32 %v675, %v1375
      %v1422 = vsub.f32 %v678, %v1378
      %v1423 = vsub.f32 %v683, %v1381
      %v1424 = vsub.f32 %v686, %v1384
      %v1425 = vsub.f32 %v691, %v1387
      %v1426 = vsub.f32 %v694, %v1390
      %v1427 = vsub.f32 %v699, %v1393
      %v1428 = vsub.f32 %v702, %v1396
      %v1429 = vmul.f32 %v1397, 1.442695
      %v1430 = vpow.pop %v1429
      %v1431 = vmul.f32 %v1398, 1.442695
      %v1432 = vpow.pop %v1431
      %v1433 = vmul.f32 %v1399, 1.442695
      %v1434 = vpow.pop %v1433
      %v1435 = vmul.f32 %v1400, 1.442695
      %v1436 = vpow.pop %v1435
      %v1437 = vmul.f32 %v1401, 1.442695
      %v1438 = vpow.pop %v1437
      %v1439 = vmul.f32 %v1402, 1.442695
      %v1440 = vpow.pop %v1439
      %v1441 = vmul.f32 %v1403, 1.442695
      %v1442 = vpow.pop %v1441
      %v1443 = vmul.f32 %v1404, 1.442695
      %v1444 = vpow.pop %v1443
      %v1445 = vmul.f32 %v1405, 1.442695
      %v1446 = vpow.pop %v1445
      %v1447 = vmul.f32 %v1406, 1.442695
      %v1448 = vpow.pop %v1447
      %v1449 = vmul.f32 %v1407, 1.442695
      %v1450 = vpow.pop %v1449
      %v1451 = vmul.f32 %v1408, 1.442695
      %v1452 = vpow.pop %v1451
      %v1453 = vmul.f32 %v1409, 1.442695
      %v1454 = vpow.pop %v1453
      %v1455 = vmul.f32 %v1410, 1.442695
      %v1456 = vpow.pop %v1455
      %v1457 = vmul.f32 %v1411, 1.442695
      %v1458 = vpow.pop %v1457
      %v1459 = vmul.f32 %v1412, 1.442695
      %v1460 = vpow.pop %v1459
      %v1461 = vmul.f32 %v1413, 1.442695
      %v1462 = vpow.pop %v1461
      %v1463 = vmul.f32 %v1414, 1.442695
      %v1464 = vpow.pop %v1463
      %v1465 = vmul.f32 %v1415, 1.442695
      %v1466 = vpow.pop %v1465
      %v1467 = vmul.f32 %v1416, 1.442695
      %v1468 = vpow.pop %v1467
      %v1469 = vmul.f32 %v1417, 1.442695
      %v1470 = vpow.pop %v1469
      %v1471 = vmul.f32 %v1418, 1.442695
      %v1472 = vpow.pop %v1471
      %v1473 = vmul.f32 %v1419, 1.442695
      %v1474 = vpow.pop %v1473
      %v1475 = vmul.f32 %v1420, 1.442695
      %v1476 = vpow.pop %v1475
      %v1477 = vmul.f32 %v1421, 1.442695
      %v1478 = vpow.pop %v1477
      %v1479 = vmul.f32 %v1422, 1.442695
      %v1480 = vpow.pop %v1479
      %v1481 = vmul.f32 %v1423, 1.442695
      %v1482 = vpow.pop %v1481
      %v1483 = vmul.f32 %v1424, 1.442695
      %v1484 = vpow.pop %v1483
      %v1485 = vmul.f32 %v1425, 1.442695
      %v1486 = vpow.pop %v1485
      %v1487 = vmul.f32 %v1426, 1.442695
      %v1488 = vpow.pop %v1487
      %v1489 = vmul.f32 %v1427, 1.442695
      %v1490 = vpow.pop %v1489
      %v1491 = vmul.f32 %v1428, 1.442695
      %v1492 = vpow.pop %v1491
      %1525 = vrot.lane.b32.xlu0 %v1430, 96
      %v1526 = vpop.permute.xlu0 %1525
      %1527 = vrot.lane.b32.xlu0 %v1432, 96
      %v1528 = vpop.permute.xlu0 %1527
      %1529 = vrot.lane.b32.xlu0 %v1434, 96
      %v1530 = vpop.permute.xlu0 %1529
      %1531 = vrot.lane.b32.xlu0 %v1436, 96
      %v1532 = vpop.permute.xlu0 %1531
      %1533 = vrot.lane.b32.xlu0 %v1438, 96
      %v1534 = vpop.permute.xlu0 %1533
      %1535 = vrot.lane.b32.xlu0 %v1440, 96
      %v1536 = vpop.permute.xlu0 %1535
      %1537 = vrot.lane.b32.xlu0 %v1442, 96
      %v1538 = vpop.permute.xlu0 %1537
      %1539 = vrot.lane.b32.xlu0 %v1444, 96
      %v1540 = vpop.permute.xlu0 %1539
      %1541 = vrot.lane.b32.xlu0 %v1446, 96
      %v1542 = vpop.permute.xlu0 %1541
      %1543 = vrot.lane.b32.xlu0 %v1448, 96
      %v1544 = vpop.permute.xlu0 %1543
      %1545 = vrot.lane.b32.xlu0 %v1450, 96
      %v1546 = vpop.permute.xlu0 %1545
      %1547 = vrot.lane.b32.xlu0 %v1452, 96
      %v1548 = vpop.permute.xlu0 %1547
      %1549 = vrot.lane.b32.xlu0 %v1454, 96
      %v1550 = vpop.permute.xlu0 %1549
      %1551 = vrot.lane.b32.xlu0 %v1456, 96
      %v1552 = vpop.permute.xlu0 %1551
      %1553 = vrot.lane.b32.xlu0 %v1458, 96
      %v1554 = vpop.permute.xlu0 %1553
      %1555 = vrot.lane.b32.xlu0 %v1460, 96
      %v1556 = vpop.permute.xlu0 %1555
      %1557 = vrot.lane.b32.xlu0 %v1462, 96
      %v1558 = vpop.permute.xlu0 %1557
      %1559 = vrot.lane.b32.xlu0 %v1464, 96
      %v1560 = vpop.permute.xlu0 %1559
      %1561 = vrot.lane.b32.xlu0 %v1466, 96
      %v1562 = vpop.permute.xlu0 %1561
      %1563 = vrot.lane.b32.xlu0 %v1468, 96
      %v1564 = vpop.permute.xlu0 %1563
      %1565 = vrot.lane.b32.xlu0 %v1470, 96
      %v1566 = vpop.permute.xlu0 %1565
      %1567 = vrot.lane.b32.xlu0 %v1472, 96
      %v1568 = vpop.permute.xlu0 %1567
      %1569 = vrot.lane.b32.xlu0 %v1474, 96
      %v1570 = vpop.permute.xlu0 %1569
      %1571 = vrot.lane.b32.xlu0 %v1476, 96
      %v1572 = vpop.permute.xlu0 %1571
      %1573 = vrot.lane.b32.xlu0 %v1478, 96
      %v1574 = vpop.permute.xlu0 %1573
      %1575 = vrot.lane.b32.xlu0 %v1480, 96
      %v1576 = vpop.permute.xlu0 %1575
      %1577 = vrot.lane.b32.xlu0 %v1482, 96
      %v1578 = vpop.permute.xlu0 %1577
      %1579 = vrot.lane.b32.xlu0 %v1484, 96
      %v1580 = vpop.permute.xlu0 %1579
      %1581 = vrot.lane.b32.xlu0 %v1486, 96
      %v1582 = vpop.permute.xlu0 %1581
      %1583 = vrot.lane.b32.xlu0 %v1488, 96
      %v1584 = vpop.permute.xlu0 %1583
      %1585 = vrot.lane.b32.xlu0 %v1490, 96
      %v1586 = vpop.permute.xlu0 %1585
      %1587 = vrot.lane.b32.xlu0 %v1492, 96
      %v1588 = vpop.permute.xlu0 %1587
      %v1621 = vsel %vm495, %v1526, 0.0
      %1622 = vadd.xlane.f32.xlu0 %v1621
      %v1623 = vpop.xlane.xlu0 %1622
      %v1624 = vsel %vm495, %v1528, 0.0
      %1625 = vadd.xlane.f32.xlu0 %v1624
      %v1626 = vpop.xlane.xlu0 %1625
      %v1627 = vsel %vm495, %v1530, 0.0
      %1628 = vadd.xlane.f32.xlu0 %v1627
      %v1629 = vpop.xlane.xlu0 %1628
      %v1630 = vsel %vm495, %v1532, 0.0
      %1631 = vadd.xlane.f32.xlu0 %v1630
      %v1632 = vpop.xlane.xlu0 %1631
      %v1633 = vsel %vm495, %v1534, 0.0
      %1634 = vadd.xlane.f32.xlu0 %v1633
      %v1635 = vpop.xlane.xlu0 %1634
      %v1636 = vsel %vm495, %v1536, 0.0
      %1637 = vadd.xlane.f32.xlu0 %v1636
      %v1638 = vpop.xlane.xlu0 %1637
      %v1639 = vsel %vm495, %v1538, 0.0
      %1640 = vadd.xlane.f32.xlu0 %v1639
      %v1641 = vpop.xlane.xlu0 %1640
      %v1642 = vsel %vm495, %v1540, 0.0
      %1643 = vadd.xlane.f32.xlu0 %v1642
      %v1644 = vpop.xlane.xlu0 %1643
      %v1645 = vsel %vm495, %v1542, 0.0
      %1646 = vadd.xlane.f32.xlu0 %v1645
      %v1647 = vpop.xlane.xlu0 %1646
      %v1648 = vsel %vm495, %v1544, 0.0
      %1649 = vadd.xlane.f32.xlu0 %v1648
      %v1650 = vpop.xlane.xlu0 %1649
      %v1651 = vsel %vm495, %v1546, 0.0
      %1652 = vadd.xlane.f32.xlu0 %v1651
      %v1653 = vpop.xlane.xlu0 %1652
      %v1654 = vsel %vm495, %v1548, 0.0
      %1655 = vadd.xlane.f32.xlu0 %v1654
      %v1656 = vpop.xlane.xlu0 %1655
      %v1657 = vsel %vm495, %v1550, 0.0
      %1658 = vadd.xlane.f32.xlu0 %v1657
      %v1659 = vpop.xlane.xlu0 %1658
      %v1660 = vsel %vm495, %v1552, 0.0
      %1661 = vadd.xlane.f32.xlu0 %v1660
      %v1662 = vpop.xlane.xlu0 %1661
      %v1663 = vsel %vm495, %v1554, 0.0
      %1664 = vadd.xlane.f32.xlu0 %v1663
      %v1665 = vpop.xlane.xlu0 %1664
      %v1666 = vsel %vm495, %v1556, 0.0
      %1667 = vadd.xlane.f32.xlu0 %v1666
      %v1668 = vpop.xlane.xlu0 %1667
      %v1669 = vsel %vm495, %v1558, 0.0
      %1670 = vadd.xlane.f32.xlu0 %v1669
      %v1671 = vpop.xlane.xlu0 %1670
      %v1672 = vsel %vm495, %v1560, 0.0
      %1673 = vadd.xlane.f32.xlu0 %v1672
      %v1674 = vpop.xlane.xlu0 %1673
      %v1675 = vsel %vm495, %v1562, 0.0
      %1676 = vadd.xlane.f32.xlu0 %v1675
      %v1677 = vpop.xlane.xlu0 %1676
      %v1678 = vsel %vm495, %v1564, 0.0
      %1679 = vadd.xlane.f32.xlu0 %v1678
      %v1680 = vpop.xlane.xlu0 %1679
      %v1681 = vsel %vm495, %v1566, 0.0
      %1682 = vadd.xlane.f32.xlu0 %v1681
      %v1683 = vpop.xlane.xlu0 %1682
      %v1684 = vsel %vm495, %v1568, 0.0
      %1685 = vadd.xlane.f32.xlu0 %v1684
      %v1686 = vpop.xlane.xlu0 %1685
      %v1687 = vsel %vm495, %v1570, 0.0
      %1688 = vadd.xlane.f32.xlu0 %v1687
      %v1689 = vpop.xlane.xlu0 %1688
      %v1690 = vsel %vm495, %v1572, 0.0
      %1691 = vadd.xlane.f32.xlu0 %v1690
      %v1692 = vpop.xlane.xlu0 %1691
      %v1693 = vsel %vm495, %v1574, 0.0
      %1694 = vadd.xlane.f32.xlu0 %v1693
      %v1695 = vpop.xlane.xlu0 %1694
      %v1696 = vsel %vm495, %v1576, 0.0
      %1697 = vadd.xlane.f32.xlu0 %v1696
      %v1698 = vpop.xlane.xlu0 %1697
      %v1699 = vsel %vm495, %v1578, 0.0
      %1700 = vadd.xlane.f32.xlu0 %v1699
      %v1701 = vpop.xlane.xlu0 %1700
      %v1702 = vsel %vm495, %v1580, 0.0
      %1703 = vadd.xlane.f32.xlu0 %v1702
      %v1704 = vpop.xlane.xlu0 %1703
      %v1705 = vsel %vm495, %v1582, 0.0
      %1706 = vadd.xlane.f32.xlu0 %v1705
      %v1707 = vpop.xlane.xlu0 %1706
      %v1708 = vsel %vm495, %v1584, 0.0
      %1709 = vadd.xlane.f32.xlu0 %v1708
      %v1710 = vpop.xlane.xlu0 %1709
      %v1711 = vsel %vm495, %v1586, 0.0
      %1712 = vadd.xlane.f32.xlu0 %v1711
      %v1713 = vpop.xlane.xlu0 %1712
      %v1714 = vsel %vm495, %v1588, 0.0
      %1715 = vadd.xlane.f32.xlu0 %v1714
      %v1716 = vpop.xlane.xlu0 %1715
      %v1717 = vlog2.pop %v1623
      %v1718 = vmul.f32 %v1717, 0.6931472
      %v1719 = vlog2.pop %v1626
      %v1720 = vmul.f32 %v1719, 0.6931472
      %v1721 = vlog2.pop %v1629
      %v1722 = vmul.f32 %v1721, 0.6931472
      %v1723 = vlog2.pop %v1632
      %v1724 = vmul.f32 %v1723, 0.6931472
      %v1725 = vlog2.pop %v1635
      %v1726 = vmul.f32 %v1725, 0.6931472
      %v1727 = vlog2.pop %v1638
      %v1728 = vmul.f32 %v1727, 0.6931472
      %v1729 = vlog2.pop %v1641
      %v1730 = vmul.f32 %v1729, 0.6931472
      %v1731 = vlog2.pop %v1644
      %v1732 = vmul.f32 %v1731, 0.6931472
      %v1733 = vlog2.pop %v1647
      %v1734 = vmul.f32 %v1733, 0.6931472
      %v1735 = vlog2.pop %v1650
      %v1736 = vmul.f32 %v1735, 0.6931472
      %v1737 = vlog2.pop %v1653
      %v1738 = vmul.f32 %v1737, 0.6931472
      %v1739 = vlog2.pop %v1656
      %v1740 = vmul.f32 %v1739, 0.6931472
      %v1741 = vlog2.pop %v1659
      %v1742 = vmul.f32 %v1741, 0.6931472
      %v1743 = vlog2.pop %v1662
      %v1744 = vmul.f32 %v1743, 0.6931472
      %v1745 = vlog2.pop %v1665
      %v1746 = vmul.f32 %v1745, 0.6931472
      %v1747 = vlog2.pop %v1668
      %v1748 = vmul.f32 %v1747, 0.6931472
      %v1749 = vlog2.pop %v1671
      %v1750 = vmul.f32 %v1749, 0.6931472
      %v1751 = vlog2.pop %v1674
      %v1752 = vmul.f32 %v1751, 0.6931472
      %v1753 = vlog2.pop %v1677
      %v1754 = vmul.f32 %v1753, 0.6931472
      %v1755 = vlog2.pop %v1680
      %v1756 = vmul.f32 %v1755, 0.6931472
      %v1757 = vlog2.pop %v1683
      %v1758 = vmul.f32 %v1757, 0.6931472
      %v1759 = vlog2.pop %v1686
      %v1760 = vmul.f32 %v1759, 0.6931472
      %v1761 = vlog2.pop %v1689
      %v1762 = vmul.f32 %v1761, 0.6931472
      %v1763 = vlog2.pop %v1692
      %v1764 = vmul.f32 %v1763, 0.6931472
      %v1765 = vlog2.pop %v1695
      %v1766 = vmul.f32 %v1765, 0.6931472
      %v1767 = vlog2.pop %v1698
      %v1768 = vmul.f32 %v1767, 0.6931472
      %v1769 = vlog2.pop %v1701
      %v1770 = vmul.f32 %v1769, 0.6931472
      %v1771 = vlog2.pop %v1704
      %v1772 = vmul.f32 %v1771, 0.6931472
      %v1773 = vlog2.pop %v1707
      %v1774 = vmul.f32 %v1773, 0.6931472
      %v1775 = vlog2.pop %v1710
      %v1776 = vmul.f32 %v1775, 0.6931472
      %v1777 = vlog2.pop %v1713
      %v1778 = vmul.f32 %v1777, 0.6931472
      %v1779 = vlog2.pop %v1716
      %v1780 = vmul.f32 %v1779, 0.6931472
      %v1781 = vadd.f32 %v1303, %v1718
      %v1782 = vadd.f32 %v1306, %v1720
      %v1783 = vadd.f32 %v1309, %v1722
      %v1784 = vadd.f32 %v1312, %v1724
      %v1785 = vadd.f32 %v1315, %v1726
      %v1786 = vadd.f32 %v1318, %v1728
      %v1787 = vadd.f32 %v1321, %v1730
      %v1788 = vadd.f32 %v1324, %v1732
      %v1789 = vadd.f32 %v1327, %v1734
      %v1790 = vadd.f32 %v1330, %v1736
      %v1791 = vadd.f32 %v1333, %v1738
      %v1792 = vadd.f32 %v1336, %v1740
      %v1793 = vadd.f32 %v1339, %v1742
      %v1794 = vadd.f32 %v1342, %v1744
      %v1795 = vadd.f32 %v1345, %v1746
      %v1796 = vadd.f32 %v1348, %v1748
      %v1797 = vadd.f32 %v1351, %v1750
      %v1798 = vadd.f32 %v1354, %v1752
      %v1799 = vadd.f32 %v1357, %v1754
      %v1800 = vadd.f32 %v1360, %v1756
      %v1801 = vadd.f32 %v1363, %v1758
      %v1802 = vadd.f32 %v1366, %v1760
      %v1803 = vadd.f32 %v1369, %v1762
      %v1804 = vadd.f32 %v1372, %v1764
      %v1805 = vadd.f32 %v1375, %v1766
      %v1806 = vadd.f32 %v1378, %v1768
      %v1807 = vadd.f32 %v1381, %v1770
      %v1808 = vadd.f32 %v1384, %v1772
      %v1809 = vadd.f32 %v1387, %v1774
      %v1810 = vadd.f32 %v1390, %v1776
      %v1811 = vadd.f32 %v1393, %v1778
      %v1812 = vadd.f32 %v1396, %v1780
      %v1813 = vld [vmem:[%s335] sm:$0xff]
      %v1814 = vld [vmem:[%s335 + $0x8] sm:$0xff]
      %v1815 = vld [vmem:[%s335 + $0x10] sm:$0xff]
      %v1816 = vld [vmem:[%s335 + $0x18] sm:$0xff]
      %v1817 = vld [vmem:[%s335 + $0x20] sm:$0xff]
      %v1818 = vld [vmem:[%s335 + $0x28] sm:$0xff]
      %v1819 = vld [vmem:[%s335 + $0x30] sm:$0xff]
      %v1820 = vld [vmem:[%s335 + $0x38] sm:$0xff]
      %v1821 = vld [vmem:[%s335 + $0x40] sm:$0xff]
      %v1822 = vld [vmem:[%s335 + $0x48] sm:$0xff]
      %v1823 = vld [vmem:[%s335 + $0x50] sm:$0xff]
      %v1824 = vld [vmem:[%s335 + $0x58] sm:$0xff]
      %v1825 = vld [vmem:[%s335 + $0x60] sm:$0xff]
      %v1826 = vld [vmem:[%s335 + $0x68] sm:$0xff]
      %v1827 = vld [vmem:[%s335 + $0x70] sm:$0xff]
      %v1828 = vld [vmem:[%s335 + $0x78] sm:$0xff]
      %v1829 = vld [vmem:[%s335 + $0x80] sm:$0xff]
      %v1830 = vld [vmem:[%s335 + $0x88] sm:$0xff]
      %v1831 = vld [vmem:[%s335 + $0x90] sm:$0xff]
      %v1832 = vld [vmem:[%s335 + $0x98] sm:$0xff]
      %v1833 = vld [vmem:[%s335 + $0xa0] sm:$0xff]
      %v1834 = vld [vmem:[%s335 + $0xa8] sm:$0xff]
      %v1835 = vld [vmem:[%s335 + $0xb0] sm:$0xff]
      %v1836 = vld [vmem:[%s335 + $0xb8] sm:$0xff]
      %v1837 = vld [vmem:[%s335 + $0xc0] sm:$0xff]
      %v1838 = vld [vmem:[%s335 + $0xc8] sm:$0xff]
      %v1839 = vld [vmem:[%s335 + $0xd0] sm:$0xff]
      %v1840 = vld [vmem:[%s335 + $0xd8] sm:$0xff]
      %v1841 = vld [vmem:[%s335 + $0xe0] sm:$0xff]
      %v1842 = vld [vmem:[%s335 + $0xe8] sm:$0xff]
      %v1843 = vld [vmem:[%s335 + $0xf0] sm:$0xff]
      %v1844 = vld [vmem:[%s335 + $0xf8] sm:$0xff]
      %v1845 = vlaneseq
      %v1846 = vand.u32 %v1845, 127
      %1847 = vset.pattern.permute.xlu0 0
      %1848 = vperm.xlu0 %1847, %v1813
      %v1849 = vpop.permute.xlu0 %1848
      %1850 = vset.pattern.permute.xlu0 0
      %1851 = vperm.xlu0 %1850, %v1814
      %v1852 = vpop.permute.xlu0 %1851
      %1853 = vset.pattern.permute.xlu0 0
      %1854 = vperm.xlu0 %1853, %v1815
      %v1855 = vpop.permute.xlu0 %1854
      %1856 = vset.pattern.permute.xlu0 0
      %1857 = vperm.xlu0 %1856, %v1816
      %v1858 = vpop.permute.xlu0 %1857
      %1859 = vset.pattern.permute.xlu0 0
      %1860 = vperm.xlu0 %1859, %v1817
      %v1861 = vpop.permute.xlu0 %1860
      %1862 = vset.pattern.permute.xlu0 0
      %1863 = vperm.xlu0 %1862, %v1818
      %v1864 = vpop.permute.xlu0 %1863
      %1865 = vset.pattern.permute.xlu0 0
      %1866 = vperm.xlu0 %1865, %v1819
      %v1867 = vpop.permute.xlu0 %1866
      %1868 = vset.pattern.permute.xlu0 0
      %1869 = vperm.xlu0 %1868, %v1820
      %v1870 = vpop.permute.xlu0 %1869
      %1871 = vset.pattern.permute.xlu0 0
      %1872 = vperm.xlu0 %1871, %v1821
      %v1873 = vpop.permute.xlu0 %1872
      %1874 = vset.pattern.permute.xlu0 0
      %1875 = vperm.xlu0 %1874, %v1822
      %v1876 = vpop.permute.xlu0 %1875
      %1877 = vset.pattern.permute.xlu0 0
      %1878 = vperm.xlu0 %1877, %v1823
      %v1879 = vpop.permute.xlu0 %1878
      %1880 = vset.pattern.permute.xlu0 0
      %1881 = vperm.xlu0 %1880, %v1824
      %v1882 = vpop.permute.xlu0 %1881
      %1883 = vset.pattern.permute.xlu0 0
      %1884 = vperm.xlu0 %1883, %v1825
      %v1885 = vpop.permute.xlu0 %1884
      %1886 = vset.pattern.permute.xlu0 0
      %1887 = vperm.xlu0 %1886, %v1826
      %v1888 = vpop.permute.xlu0 %1887
      %1889 = vset.pattern.permute.xlu0 0
      %1890 = vperm.xlu0 %1889, %v1827
      %v1891 = vpop.permute.xlu0 %1890
      %1892 = vset.pattern.permute.xlu0 0
      %1893 = vperm.xlu0 %1892, %v1828
      %v1894 = vpop.permute.xlu0 %1893
      %1895 = vset.pattern.permute.xlu0 0
      %1896 = vperm.xlu0 %1895, %v1829
      %v1897 = vpop.permute.xlu0 %1896
      %1898 = vset.pattern.permute.xlu0 0
      %1899 = vperm.xlu0 %1898, %v1830
      %v1900 = vpop.permute.xlu0 %1899
      %1901 = vset.pattern.permute.xlu0 0
      %1902 = vperm.xlu0 %1901, %v1831
      %v1903 = vpop.permute.xlu0 %1902
      %1904 = vset.pattern.permute.xlu0 0
      %1905 = vperm.xlu0 %1904, %v1832
      %v1906 = vpop.permute.xlu0 %1905
      %1907 = vset.pattern.permute.xlu0 0
      %1908 = vperm.xlu0 %1907, %v1833
      %v1909 = vpop.permute.xlu0 %1908
      %1910 = vset.pattern.permute.xlu0 0
      %1911 = vperm.xlu0 %1910, %v1834
      %v1912 = vpop.permute.xlu0 %1911
      %1913 = vset.pattern.permute.xlu0 0
      %1914 = vperm.xlu0 %1913, %v1835
      %v1915 = vpop.permute.xlu0 %1914
      %1916 = vset.pattern.permute.xlu0 0
      %1917 = vperm.xlu0 %1916, %v1836
      %v1918 = vpop.permute.xlu0 %1917
      %1919 = vset.pattern.permute.xlu0 0
      %1920 = vperm.xlu0 %1919, %v1837
      %v1921 = vpop.permute.xlu0 %1920
      %1922 = vset.pattern.permute.xlu0 0
      %1923 = vperm.xlu0 %1922, %v1838
      %v1924 = vpop.permute.xlu0 %1923
      %1925 = vset.pattern.permute.xlu0 0
      %1926 = vperm.xlu0 %1925, %v1839
      %v1927 = vpop.permute.xlu0 %1926
      %1928 = vset.pattern.permute.xlu0 0
      %1929 = vperm.xlu0 %1928, %v1840
      %v1930 = vpop.permute.xlu0 %1929
      %1931 = vset.pattern.permute.xlu0 0
      %1932 = vperm.xlu0 %1931, %v1841
      %v1933 = vpop.permute.xlu0 %1932
      %1934 = vset.pattern.permute.xlu0 0
      %1935 = vperm.xlu0 %1934, %v1842
      %v1936 = vpop.permute.xlu0 %1935
      %1937 = vset.pattern.permute.xlu0 0
      %1938 = vperm.xlu0 %1937, %v1843
      %v1939 = vpop.permute.xlu0 %1938
      %1940 = vset.pattern.permute.xlu0 0
      %1941 = vperm.xlu0 %1940, %v1844
      %v1942 = vpop.permute.xlu0 %1941
      %vm1943 = vcmp.eq.s32.totalorder %v1846, %v1849
      %vm1944 = vcmp.eq.s32.totalorder %v1846, %v1852
      %vm1945 = vcmp.eq.s32.totalorder %v1846, %v1855
      %vm1946 = vcmp.eq.s32.totalorder %v1846, %v1858
      %vm1947 = vcmp.eq.s32.totalorder %v1846, %v1861
      %vm1948 = vcmp.eq.s32.totalorder %v1846, %v1864
      %vm1949 = vcmp.eq.s32.totalorder %v1846, %v1867
      %vm1950 = vcmp.eq.s32.totalorder %v1846, %v1870
      %vm1951 = vcmp.eq.s32.totalorder %v1846, %v1873
      %vm1952 = vcmp.eq.s32.totalorder %v1846, %v1876
      %vm1953 = vcmp.eq.s32.totalorder %v1846, %v1879
      %vm1954 = vcmp.eq.s32.totalorder %v1846, %v1882
      %vm1955 = vcmp.eq.s32.totalorder %v1846, %v1885
      %vm1956 = vcmp.eq.s32.totalorder %v1846, %v1888
      %vm1957 = vcmp.eq.s32.totalorder %v1846, %v1891
      %vm1958 = vcmp.eq.s32.totalorder %v1846, %v1894
      %vm1959 = vcmp.eq.s32.totalorder %v1846, %v1897
      %vm1960 = vcmp.eq.s32.totalorder %v1846, %v1900
      %vm1961 = vcmp.eq.s32.totalorder %v1846, %v1903
      %vm1962 = vcmp.eq.s32.totalorder %v1846, %v1906
      %vm1963 = vcmp.eq.s32.totalorder %v1846, %v1909
      %vm1964 = vcmp.eq.s32.totalorder %v1846, %v1912
      %vm1965 = vcmp.eq.s32.totalorder %v1846, %v1915
      %vm1966 = vcmp.eq.s32.totalorder %v1846, %v1918
      %vm1967 = vcmp.eq.s32.totalorder %v1846, %v1921
      %vm1968 = vcmp.eq.s32.totalorder %v1846, %v1924
      %vm1969 = vcmp.eq.s32.totalorder %v1846, %v1927
      %vm1970 = vcmp.eq.s32.totalorder %v1846, %v1930
      %vm1971 = vcmp.eq.s32.totalorder %v1846, %v1933
      %vm1972 = vcmp.eq.s32.totalorder %v1846, %v1936
      %vm1973 = vcmp.eq.s32.totalorder %v1846, %v1939
      %vm1974 = vcmp.eq.s32.totalorder %v1846, %v1942
      %2007 = vrot.lane.b32.xlu0 %v579, 96
      %v2008 = vpop.permute.xlu0 %2007
      %2009 = vrot.lane.b32.xlu0 %v582, 96
      %v2010 = vpop.permute.xlu0 %2009
      %2011 = vrot.lane.b32.xlu0 %v587, 96
      %v2012 = vpop.permute.xlu0 %2011
      %2013 = vrot.lane.b32.xlu0 %v590, 96
      %v2014 = vpop.permute.xlu0 %2013
      %2015 = vrot.lane.b32.xlu0 %v595, 96
      %v2016 = vpop.permute.xlu0 %2015
      %2017 = vrot.lane.b32.xlu0 %v598, 96
      %v2018 = vpop.permute.xlu0 %2017
      %2019 = vrot.lane.b32.xlu0 %v603, 96
      %v2020 = vpop.permute.xlu0 %2019
      %2021 = vrot.lane.b32.xlu0 %v606, 96
      %v2022 = vpop.permute.xlu0 %2021
      %2023 = vrot.lane.b32.xlu0 %v611, 96
      %v2024 = vpop.permute.xlu0 %2023
      %2025 = vrot.lane.b32.xlu0 %v614, 96
      %v2026 = vpop.permute.xlu0 %2025
      %2027 = vrot.lane.b32.xlu0 %v619, 96
      %v2028 = vpop.permute.xlu0 %2027
      %2029 = vrot.lane.b32.xlu0 %v622, 96
      %v2030 = vpop.permute.xlu0 %2029
      %2031 = vrot.lane.b32.xlu0 %v627, 96
      %v2032 = vpop.permute.xlu0 %2031
      %2033 = vrot.lane.b32.xlu0 %v630, 96
      %v2034 = vpop.permute.xlu0 %2033
      %2035 = vrot.lane.b32.xlu0 %v635, 96
      %v2036 = vpop.permute.xlu0 %2035
      %2037 = vrot.lane.b32.xlu0 %v638, 96
      %v2038 = vpop.permute.xlu0 %2037
      %2039 = vrot.lane.b32.xlu0 %v643, 96
      %v2040 = vpop.permute.xlu0 %2039
      %2041 = vrot.lane.b32.xlu0 %v646, 96
      %v2042 = vpop.permute.xlu0 %2041
      %2043 = vrot.lane.b32.xlu0 %v651, 96
      %v2044 = vpop.permute.xlu0 %2043
      %2045 = vrot.lane.b32.xlu0 %v654, 96
      %v2046 = vpop.permute.xlu0 %2045
      %2047 = vrot.lane.b32.xlu0 %v659, 96
      %v2048 = vpop.permute.xlu0 %2047
      %2049 = vrot.lane.b32.xlu0 %v662, 96
      %v2050 = vpop.permute.xlu0 %2049
      %2051 = vrot.lane.b32.xlu0 %v667, 96
      %v2052 = vpop.permute.xlu0 %2051
      %2053 = vrot.lane.b32.xlu0 %v670, 96
      %v2054 = vpop.permute.xlu0 %2053
      %2055 = vrot.lane.b32.xlu0 %v675, 96
      %v2056 = vpop.permute.xlu0 %2055
      %2057 = vrot.lane.b32.xlu0 %v678, 96
      %v2058 = vpop.permute.xlu0 %2057
      %2059 = vrot.lane.b32.xlu0 %v683, 96
      %v2060 = vpop.permute.xlu0 %2059
      %2061 = vrot.lane.b32.xlu0 %v686, 96
      %v2062 = vpop.permute.xlu0 %2061
      %2063 = vrot.lane.b32.xlu0 %v691, 96
      %v2064 = vpop.permute.xlu0 %2063
      %2065 = vrot.lane.b32.xlu0 %v694, 96
      %v2066 = vpop.permute.xlu0 %2065
      %2067 = vrot.lane.b32.xlu0 %v699, 96
      %v2068 = vpop.permute.xlu0 %2067
      %2069 = vrot.lane.b32.xlu0 %v702, 96
      %v2070 = vpop.permute.xlu0 %2069
      %v2103 = vsel %vm1943, %v2008, 0.0
      %v2104 = vsel %vm1944, %v2010, 0.0
      %v2105 = vsel %vm1945, %v2012, 0.0
      %v2106 = vsel %vm1946, %v2014, 0.0
      %v2107 = vsel %vm1947, %v2016, 0.0
      %v2108 = vsel %vm1948, %v2018, 0.0
      %v2109 = vsel %vm1949, %v2020, 0.0
      %v2110 = vsel %vm1950, %v2022, 0.0
      %v2111 = vsel %vm1951, %v2024, 0.0
      %v2112 = vsel %vm1952, %v2026, 0.0
      %v2113 = vsel %vm1953, %v2028, 0.0
      %v2114 = vsel %vm1954, %v2030, 0.0
      %v2115 = vsel %vm1955, %v2032, 0.0
      %v2116 = vsel %vm1956, %v2034, 0.0
      %v2117 = vsel %vm1957, %v2036, 0.0
      %v2118 = vsel %vm1958, %v2038, 0.0
      %v2119 = vsel %vm1959, %v2040, 0.0
      %v2120 = vsel %vm1960, %v2042, 0.0
      %v2121 = vsel %vm1961, %v2044, 0.0
      %v2122 = vsel %vm1962, %v2046, 0.0
      %v2123 = vsel %vm1963, %v2048, 0.0
      %v2124 = vsel %vm1964, %v2050, 0.0
      %v2125 = vsel %vm1965, %v2052, 0.0
      %v2126 = vsel %vm1966, %v2054, 0.0
      %v2127 = vsel %vm1967, %v2056, 0.0
      %v2128 = vsel %vm1968, %v2058, 0.0
      %v2129 = vsel %vm1969, %v2060, 0.0
      %v2130 = vsel %vm1970, %v2062, 0.0
      %v2131 = vsel %vm1971, %v2064, 0.0
      %v2132 = vsel %vm1972, %v2066, 0.0
      %v2133 = vsel %vm1973, %v2068, 0.0
      %v2134 = vsel %vm1974, %v2070, 0.0
      %v2135 = vsel %vm495, %v2103, 0.0
      %2136 = vadd.xlane.f32.xlu0 %v2135
      %v2137 = vpop.xlane.xlu0 %2136
      %v2138 = vsel %vm495, %v2104, 0.0
      %2139 = vadd.xlane.f32.xlu0 %v2138
      %v2140 = vpop.xlane.xlu0 %2139
      %v2141 = vsel %vm495, %v2105, 0.0
      %2142 = vadd.xlane.f32.xlu0 %v2141
      %v2143 = vpop.xlane.xlu0 %2142
      %v2144 = vsel %vm495, %v2106, 0.0
      %2145 = vadd.xlane.f32.xlu0 %v2144
      %v2146 = vpop.xlane.xlu0 %2145
      %v2147 = vsel %vm495, %v2107, 0.0
      %2148 = vadd.xlane.f32.xlu0 %v2147
      %v2149 = vpop.xlane.xlu0 %2148
      %v2150 = vsel %vm495, %v2108, 0.0
      %2151 = vadd.xlane.f32.xlu0 %v2150
      %v2152 = vpop.xlane.xlu0 %2151
      %v2153 = vsel %vm495, %v2109, 0.0
      %2154 = vadd.xlane.f32.xlu0 %v2153
      %v2155 = vpop.xlane.xlu0 %2154
      %v2156 = vsel %vm495, %v2110, 0.0
      %2157 = vadd.xlane.f32.xlu0 %v2156
      %v2158 = vpop.xlane.xlu0 %2157
      %v2159 = vsel %vm495, %v2111, 0.0
      %2160 = vadd.xlane.f32.xlu0 %v2159
      %v2161 = vpop.xlane.xlu0 %2160
      %v2162 = vsel %vm495, %v2112, 0.0
      %2163 = vadd.xlane.f32.xlu0 %v2162
      %v2164 = vpop.xlane.xlu0 %2163
      %v2165 = vsel %vm495, %v2113, 0.0
      %2166 = vadd.xlane.f32.xlu0 %v2165
      %v2167 = vpop.xlane.xlu0 %2166
      %v2168 = vsel %vm495, %v2114, 0.0
      %2169 = vadd.xlane.f32.xlu0 %v2168
      %v2170 = vpop.xlane.xlu0 %2169
      %v2171 = vsel %vm495, %v2115, 0.0
      %2172 = vadd.xlane.f32.xlu0 %v2171
      %v2173 = vpop.xlane.xlu0 %2172
      %v2174 = vsel %vm495, %v2116, 0.0
      %2175 = vadd.xlane.f32.xlu0 %v2174
      %v2176 = vpop.xlane.xlu0 %2175
      %v2177 = vsel %vm495, %v2117, 0.0
      %2178 = vadd.xlane.f32.xlu0 %v2177
      %v2179 = vpop.xlane.xlu0 %2178
      %v2180 = vsel %vm495, %v2118, 0.0
      %2181 = vadd.xlane.f32.xlu0 %v2180
      %v2182 = vpop.xlane.xlu0 %2181
      %v2183 = vsel %vm495, %v2119, 0.0
      %2184 = vadd.xlane.f32.xlu0 %v2183
      %v2185 = vpop.xlane.xlu0 %2184
      %v2186 = vsel %vm495, %v2120, 0.0
      %2187 = vadd.xlane.f32.xlu0 %v2186
      %v2188 = vpop.xlane.xlu0 %2187
      %v2189 = vsel %vm495, %v2121, 0.0
      %2190 = vadd.xlane.f32.xlu0 %v2189
      %v2191 = vpop.xlane.xlu0 %2190
      %v2192 = vsel %vm495, %v2122, 0.0
      %2193 = vadd.xlane.f32.xlu0 %v2192
      %v2194 = vpop.xlane.xlu0 %2193
      %v2195 = vsel %vm495, %v2123, 0.0
      %2196 = vadd.xlane.f32.xlu0 %v2195
      %v2197 = vpop.xlane.xlu0 %2196
      %v2198 = vsel %vm495, %v2124, 0.0
      %2199 = vadd.xlane.f32.xlu0 %v2198
      %v2200 = vpop.xlane.xlu0 %2199
      %v2201 = vsel %vm495, %v2125, 0.0
      %2202 = vadd.xlane.f32.xlu0 %v2201
      %v2203 = vpop.xlane.xlu0 %2202
      %v2204 = vsel %vm495, %v2126, 0.0
      %2205 = vadd.xlane.f32.xlu0 %v2204
      %v2206 = vpop.xlane.xlu0 %2205
      %v2207 = vsel %vm495, %v2127, 0.0
      %2208 = vadd.xlane.f32.xlu0 %v2207
      %v2209 = vpop.xlane.xlu0 %2208
      %v2210 = vsel %vm495, %v2128, 0.0
      %2211 = vadd.xlane.f32.xlu0 %v2210
      %v2212 = vpop.xlane.xlu0 %2211
      %v2213 = vsel %vm495, %v2129, 0.0
      %2214 = vadd.xlane.f32.xlu0 %v2213
      %v2215 = vpop.xlane.xlu0 %2214
      %v2216 = vsel %vm495, %v2130, 0.0
      %2217 = vadd.xlane.f32.xlu0 %v2216
      %v2218 = vpop.xlane.xlu0 %2217
      %v2219 = vsel %vm495, %v2131, 0.0
      %2220 = vadd.xlane.f32.xlu0 %v2219
      %v2221 = vpop.xlane.xlu0 %2220
      %v2222 = vsel %vm495, %v2132, 0.0
      %2223 = vadd.xlane.f32.xlu0 %v2222
      %v2224 = vpop.xlane.xlu0 %2223
      %v2225 = vsel %vm495, %v2133, 0.0
      %2226 = vadd.xlane.f32.xlu0 %v2225
      %v2227 = vpop.xlane.xlu0 %2226
      %v2228 = vsel %vm495, %v2134, 0.0
      %2229 = vadd.xlane.f32.xlu0 %v2228
      %v2230 = vpop.xlane.xlu0 %2229
      %v2231 = vsub.f32 %v1781, %v2137
      %v2232 = vsub.f32 %v1782, %v2140
      %v2233 = vsub.f32 %v1783, %v2143
      %v2234 = vsub.f32 %v1784, %v2146
      %v2235 = vsub.f32 %v1785, %v2149
      %v2236 = vsub.f32 %v1786, %v2152
      %v2237 = vsub.f32 %v1787, %v2155
      %v2238 = vsub.f32 %v1788, %v2158
      %v2239 = vsub.f32 %v1789, %v2161
      %v2240 = vsub.f32 %v1790, %v2164
      %v2241 = vsub.f32 %v1791, %v2167
      %v2242 = vsub.f32 %v1792, %v2170
      %v2243 = vsub.f32 %v1793, %v2173
      %v2244 = vsub.f32 %v1794, %v2176
      %v2245 = vsub.f32 %v1795, %v2179
      %v2246 = vsub.f32 %v1796, %v2182
      %v2247 = vsub.f32 %v1797, %v2185
      %v2248 = vsub.f32 %v1798, %v2188
      %v2249 = vsub.f32 %v1799, %v2191
      %v2250 = vsub.f32 %v1800, %v2194
      %v2251 = vsub.f32 %v1801, %v2197
      %v2252 = vsub.f32 %v1802, %v2200
      %v2253 = vsub.f32 %v1803, %v2203
      %v2254 = vsub.f32 %v1804, %v2206
      %v2255 = vsub.f32 %v1805, %v2209
      %v2256 = vsub.f32 %v1806, %v2212
      %v2257 = vsub.f32 %v1807, %v2215
      %v2258 = vsub.f32 %v1808, %v2218
      %v2259 = vsub.f32 %v1809, %v2221
      %v2260 = vsub.f32 %v1810, %v2224
      %v2261 = vsub.f32 %v1811, %v2227
      %v2262 = vsub.f32 %v1812, %v2230
      %v2263 = vsel %vm773, %v2231, 0.0
      %v2264 = vsel %vm774, %v2232, 0.0
      %v2265 = vsel %vm775, %v2233, 0.0
      %v2266 = vsel %vm776, %v2234, 0.0
      %v2267 = vsel %vm777, %v2235, 0.0
      %v2268 = vsel %vm778, %v2236, 0.0
      %v2269 = vsel %vm779, %v2237, 0.0
      %v2270 = vsel %vm780, %v2238, 0.0
      %v2271 = vsel %vm781, %v2239, 0.0
      %v2272 = vsel %vm782, %v2240, 0.0
      %v2273 = vsel %vm783, %v2241, 0.0
      %v2274 = vsel %vm784, %v2242, 0.0
      %v2275 = vsel %vm785, %v2243, 0.0
      %v2276 = vsel %vm786, %v2244, 0.0
      %v2277 = vsel %vm787, %v2245, 0.0
      %v2278 = vsel %vm788, %v2246, 0.0
      %v2279 = vsel %vm789, %v2247, 0.0
      %v2280 = vsel %vm790, %v2248, 0.0
      %v2281 = vsel %vm791, %v2249, 0.0
      %v2282 = vsel %vm792, %v2250, 0.0
      %v2283 = vsel %vm793, %v2251, 0.0
      %v2284 = vsel %vm794, %v2252, 0.0
      %v2285 = vsel %vm795, %v2253, 0.0
      %v2286 = vsel %vm796, %v2254, 0.0
      %v2287 = vsel %vm797, %v2255, 0.0
      %v2288 = vsel %vm798, %v2256, 0.0
      %v2289 = vsel %vm799, %v2257, 0.0
      %v2290 = vsel %vm800, %v2258, 0.0
      %v2291 = vsel %vm801, %v2259, 0.0
      %v2292 = vsel %vm802, %v2260, 0.0
      %v2293 = vsel %vm803, %v2261, 0.0
      %v2294 = vsel %vm804, %v2262, 0.0
      %v2295 = vld [vmem:[%s343] sm:$0x1]
      %v2296 = vsel %vm1222, %v2263, 0.0
      %v2297 = vsel %vm1222, %v2264, 0.0
      %v2298 = vadd.f32 %v2296, %v2297
      %v2299 = vsel %vm1222, %v2265, 0.0
      %v2300 = vadd.f32 %v2298, %v2299
      %v2301 = vsel %vm1222, %v2266, 0.0
      %v2302 = vadd.f32 %v2300, %v2301
      %v2303 = vsel %vm1222, %v2267, 0.0
      %v2304 = vadd.f32 %v2302, %v2303
      %v2305 = vsel %vm1222, %v2268, 0.0
      %v2306 = vadd.f32 %v2304, %v2305
      %v2307 = vsel %vm1222, %v2269, 0.0
      %v2308 = vadd.f32 %v2306, %v2307
      %v2309 = vsel %vm1222, %v2270, 0.0
      %v2310 = vadd.f32 %v2308, %v2309
      %v2311 = vsel %vm1222, %v2271, 0.0
      %v2312 = vadd.f32 %v2310, %v2311
      %v2313 = vsel %vm1222, %v2272, 0.0
      %v2314 = vadd.f32 %v2312, %v2313
      %v2315 = vsel %vm1222, %v2273, 0.0
      %v2316 = vadd.f32 %v2314, %v2315
      %v2317 = vsel %vm1222, %v2274, 0.0
      %v2318 = vadd.f32 %v2316, %v2317
      %v2319 = vsel %vm1222, %v2275, 0.0
      %v2320 = vadd.f32 %v2318, %v2319
      %v2321 = vsel %vm1222, %v2276, 0.0
      %v2322 = vadd.f32 %v2320, %v2321
      %v2323 = vsel %vm1222, %v2277, 0.0
      %v2324 = vadd.f32 %v2322, %v2323
      %v2325 = vsel %vm1222, %v2278, 0.0
      %v2326 = vadd.f32 %v2324, %v2325
      %v2327 = vsel %vm1222, %v2279, 0.0
      %v2328 = vadd.f32 %v2326, %v2327
      %v2329 = vsel %vm1222, %v2280, 0.0
      %v2330 = vadd.f32 %v2328, %v2329
      %v2331 = vsel %vm1222, %v2281, 0.0
      %v2332 = vadd.f32 %v2330, %v2331
      %v2333 = vsel %vm1222, %v2282, 0.0
      %v2334 = vadd.f32 %v2332, %v2333
      %v2335 = vsel %vm1222, %v2283, 0.0
      %v2336 = vadd.f32 %v2334, %v2335
      %v2337 = vsel %vm1222, %v2284, 0.0
      %v2338 = vadd.f32 %v2336, %v2337
      %v2339 = vsel %vm1222, %v2285, 0.0
      %v2340 = vadd.f32 %v2338, %v2339
      %v2341 = vsel %vm1222, %v2286, 0.0
      %v2342 = vadd.f32 %v2340, %v2341
      %v2343 = vsel %vm1222, %v2287, 0.0
      %v2344 = vadd.f32 %v2342, %v2343
      %v2345 = vsel %vm1222, %v2288, 0.0
      %v2346 = vadd.f32 %v2344, %v2345
      %v2347 = vsel %vm1222, %v2289, 0.0
      %v2348 = vadd.f32 %v2346, %v2347
      %v2349 = vsel %vm1222, %v2290, 0.0
      %v2350 = vadd.f32 %v2348, %v2349
      %v2351 = vsel %vm1222, %v2291, 0.0
      %v2352 = vadd.f32 %v2350, %v2351
      %v2353 = vsel %vm1222, %v2292, 0.0
      %v2354 = vadd.f32 %v2352, %v2353
      %v2355 = vsel %vm1222, %v2293, 0.0
      %v2356 = vadd.f32 %v2354, %v2355
      %v2357 = vsel %vm1222, %v2294, 0.0
      %v2358 = vadd.f32 %v2356, %v2357
      %2359 = vadd.xlane.f32.xlu0 %v2358
      %v2360 = vpop.xlane.xlu0 %2359
      %v2361 = vrot.slane %v2360, 4
      %v2362 = vadd.f32 %v2360, %v2361
      %v2363 = vrot.slane %v2362, 2
      %v2364 = vadd.f32 %v2362, %v2363
      %v2365 = vrot.slane %v2364, 1
      %v2366 = vadd.f32 %v2364, %v2365
      %s2367 = vtos %v2366
      %v2368 = vstv %s2367
      %v2369 = vadd.f32 %v2295, %v2368
      %2370 = vst.msk [vmem:[%s343] sm:$0x1] %vm1298, %v2369
      %vm2371 = vcmp.ge.f32.partialorder %v2137, %v1303
      %vm2372 = vcmp.ge.f32.partialorder %v2140, %v1306
      %vm2373 = vcmp.ge.f32.partialorder %v2143, %v1309
      %vm2374 = vcmp.ge.f32.partialorder %v2146, %v1312
      %vm2375 = vcmp.ge.f32.partialorder %v2149, %v1315
      %vm2376 = vcmp.ge.f32.partialorder %v2152, %v1318
      %vm2377 = vcmp.ge.f32.partialorder %v2155, %v1321
      %vm2378 = vcmp.ge.f32.partialorder %v2158, %v1324
      %vm2379 = vcmp.ge.f32.partialorder %v2161, %v1327
      %vm2380 = vcmp.ge.f32.partialorder %v2164, %v1330
      %vm2381 = vcmp.ge.f32.partialorder %v2167, %v1333
      %vm2382 = vcmp.ge.f32.partialorder %v2170, %v1336
      %vm2383 = vcmp.ge.f32.partialorder %v2173, %v1339
      %vm2384 = vcmp.ge.f32.partialorder %v2176, %v1342
      %vm2385 = vcmp.ge.f32.partialorder %v2179, %v1345
      %vm2386 = vcmp.ge.f32.partialorder %v2182, %v1348
      %vm2387 = vcmp.ge.f32.partialorder %v2185, %v1351
      %vm2388 = vcmp.ge.f32.partialorder %v2188, %v1354
      %vm2389 = vcmp.ge.f32.partialorder %v2191, %v1357
      %vm2390 = vcmp.ge.f32.partialorder %v2194, %v1360
      %vm2391 = vcmp.ge.f32.partialorder %v2197, %v1363
      %vm2392 = vcmp.ge.f32.partialorder %v2200, %v1366
      %vm2393 = vcmp.ge.f32.partialorder %v2203, %v1369
      %vm2394 = vcmp.ge.f32.partialorder %v2206, %v1372
      %vm2395 = vcmp.ge.f32.partialorder %v2209, %v1375
      %vm2396 = vcmp.ge.f32.partialorder %v2212, %v1378
      %vm2397 = vcmp.ge.f32.partialorder %v2215, %v1381
      %vm2398 = vcmp.ge.f32.partialorder %v2218, %v1384
      %vm2399 = vcmp.ge.f32.partialorder %v2221, %v1387
      %vm2400 = vcmp.ge.f32.partialorder %v2224, %v1390
      %vm2401 = vcmp.ge.f32.partialorder %v2227, %v1393
      %vm2402 = vcmp.ge.f32.partialorder %v2230, %v1396
      %vm2403 = vmand %vm773, %vm2371
      %vm2404 = vmand %vm774, %vm2372
      %vm2405 = vmand %vm775, %vm2373
      %vm2406 = vmand %vm776, %vm2374
      %vm2407 = vmand %vm777, %vm2375
      %vm2408 = vmand %vm778, %vm2376
      %vm2409 = vmand %vm779, %vm2377
      %vm2410 = vmand %vm780, %vm2378
      %vm2411 = vmand %vm781, %vm2379
      %vm2412 = vmand %vm782, %vm2380
      %vm2413 = vmand %vm783, %vm2381
      %vm2414 = vmand %vm784, %vm2382
      %vm2415 = vmand %vm785, %vm2383
      %vm2416 = vmand %vm786, %vm2384
      %vm2417 = vmand %vm787, %vm2385
      %vm2418 = vmand %vm788, %vm2386
      %vm2419 = vmand %vm789, %vm2387
      %vm2420 = vmand %vm790, %vm2388
      %vm2421 = vmand %vm791, %vm2389
      %vm2422 = vmand %vm792, %vm2390
      %vm2423 = vmand %vm793, %vm2391
      %vm2424 = vmand %vm794, %vm2392
      %vm2425 = vmand %vm795, %vm2393
      %vm2426 = vmand %vm796, %vm2394
      %vm2427 = vmand %vm797, %vm2395
      %vm2428 = vmand %vm798, %vm2396
      %vm2429 = vmand %vm799, %vm2397
      %vm2430 = vmand %vm800, %vm2398
      %vm2431 = vmand %vm801, %vm2399
      %vm2432 = vmand %vm802, %vm2400
      %vm2433 = vmand %vm803, %vm2401
      %vm2434 = vmand %vm804, %vm2402
      %v2435 = vsel %vm2403, 1.0, 0.0
      %v2436 = vsel %vm2404, 1.0, 0.0
      %v2437 = vsel %vm2405, 1.0, 0.0
      %v2438 = vsel %vm2406, 1.0, 0.0
      %v2439 = vsel %vm2407, 1.0, 0.0
      %v2440 = vsel %vm2408, 1.0, 0.0
      %v2441 = vsel %vm2409, 1.0, 0.0
      %v2442 = vsel %vm2410, 1.0, 0.0
      %v2443 = vsel %vm2411, 1.0, 0.0
      %v2444 = vsel %vm2412, 1.0, 0.0
      %v2445 = vsel %vm2413, 1.0, 0.0
      %v2446 = vsel %vm2414, 1.0, 0.0
      %v2447 = vsel %vm2415, 1.0, 0.0
      %v2448 = vsel %vm2416, 1.0, 0.0
      %v2449 = vsel %vm2417, 1.0, 0.0
      %v2450 = vsel %vm2418, 1.0, 0.0
      %v2451 = vsel %vm2419, 1.0, 0.0
      %v2452 = vsel %vm2420, 1.0, 0.0
      %v2453 = vsel %vm2421, 1.0, 0.0
      %v2454 = vsel %vm2422, 1.0, 0.0
      %v2455 = vsel %vm2423, 1.0, 0.0
      %v2456 = vsel %vm2424, 1.0, 0.0
      %v2457 = vsel %vm2425, 1.0, 0.0
      %v2458 = vsel %vm2426, 1.0, 0.0
      %v2459 = vsel %vm2427, 1.0, 0.0
      %v2460 = vsel %vm2428, 1.0, 0.0
      %v2461 = vsel %vm2429, 1.0, 0.0
      %v2462 = vsel %vm2430, 1.0, 0.0
      %v2463 = vsel %vm2431, 1.0, 0.0
      %v2464 = vsel %vm2432, 1.0, 0.0
      %v2465 = vsel %vm2433, 1.0, 0.0
      %v2466 = vsel %vm2434, 1.0, 0.0
      %v2467 = vld [vmem:[%s346] sm:$0x1]
      %v2468 = vsel %vm1222, %v2435, 0.0
      %v2469 = vsel %vm1222, %v2436, 0.0
      %v2470 = vadd.f32 %v2468, %v2469
      %v2471 = vsel %vm1222, %v2437, 0.0
      %v2472 = vadd.f32 %v2470, %v2471
      %v2473 = vsel %vm1222, %v2438, 0.0
      %v2474 = vadd.f32 %v2472, %v2473
      %v2475 = vsel %vm1222, %v2439, 0.0
      %v2476 = vadd.f32 %v2474, %v2475
      %v2477 = vsel %vm1222, %v2440, 0.0
      %v2478 = vadd.f32 %v2476, %v2477
      %v2479 = vsel %vm1222, %v2441, 0.0
      %v2480 = vadd.f32 %v2478, %v2479
      %v2481 = vsel %vm1222, %v2442, 0.0
      %v2482 = vadd.f32 %v2480, %v2481
      %v2483 = vsel %vm1222, %v2443, 0.0
      %v2484 = vadd.f32 %v2482, %v2483
      %v2485 = vsel %vm1222, %v2444, 0.0
      %v2486 = vadd.f32 %v2484, %v2485
      %v2487 = vsel %vm1222, %v2445, 0.0
      %v2488 = vadd.f32 %v2486, %v2487
      %v2489 = vsel %vm1222, %v2446, 0.0
      %v2490 = vadd.f32 %v2488, %v2489
      %v2491 = vsel %vm1222, %v2447, 0.0
      %v2492 = vadd.f32 %v2490, %v2491
      %v2493 = vsel %vm1222, %v2448, 0.0
      %v2494 = vadd.f32 %v2492, %v2493
      %v2495 = vsel %vm1222, %v2449, 0.0
      %v2496 = vadd.f32 %v2494, %v2495
      %v2497 = vsel %vm1222, %v2450, 0.0
      %v2498 = vadd.f32 %v2496, %v2497
      %v2499 = vsel %vm1222, %v2451, 0.0
      %v2500 = vadd.f32 %v2498, %v2499
      %v2501 = vsel %vm1222, %v2452, 0.0
      %v2502 = vadd.f32 %v2500, %v2501
      %v2503 = vsel %vm1222, %v2453, 0.0
      %v2504 = vadd.f32 %v2502, %v2503
      %v2505 = vsel %vm1222, %v2454, 0.0
      %v2506 = vadd.f32 %v2504, %v2505
      %v2507 = vsel %vm1222, %v2455, 0.0
      %v2508 = vadd.f32 %v2506, %v2507
      %v2509 = vsel %vm1222, %v2456, 0.0
      %v2510 = vadd.f32 %v2508, %v2509
      %v2511 = vsel %vm1222, %v2457, 0.0
      %v2512 = vadd.f32 %v2510, %v2511
      %v2513 = vsel %vm1222, %v2458, 0.0
      %v2514 = vadd.f32 %v2512, %v2513
      %v2515 = vsel %vm1222, %v2459, 0.0
      %v2516 = vadd.f32 %v2514, %v2515
      %v2517 = vsel %vm1222, %v2460, 0.0
      %v2518 = vadd.f32 %v2516, %v2517
      %v2519 = vsel %vm1222, %v2461, 0.0
      %v2520 = vadd.f32 %v2518, %v2519
      %v2521 = vsel %vm1222, %v2462, 0.0
      %v2522 = vadd.f32 %v2520, %v2521
      %v2523 = vsel %vm1222, %v2463, 0.0
      %v2524 = vadd.f32 %v2522, %v2523
      %v2525 = vsel %vm1222, %v2464, 0.0
      %v2526 = vadd.f32 %v2524, %v2525
      %v2527 = vsel %vm1222, %v2465, 0.0
      %v2528 = vadd.f32 %v2526, %v2527
      %v2529 = vsel %vm1222, %v2466, 0.0
      %v2530 = vadd.f32 %v2528, %v2529
      %2531 = vadd.xlane.f32.xlu0 %v2530
      %v2532 = vpop.xlane.xlu0 %2531
      %v2533 = vrot.slane %v2532, 4
      %v2534 = vadd.f32 %v2532, %v2533
      %v2535 = vrot.slane %v2534, 2
      %v2536 = vadd.f32 %v2534, %v2535
      %v2537 = vrot.slane %v2536, 1
      %v2538 = vadd.f32 %v2536, %v2537
      %s2539 = vtos %v2538
      %v2540 = vstv %s2539
      %v2541 = vadd.f32 %v2467, %v2540
      %2542 = vst.msk [vmem:[%s346] sm:$0x1] %vm1298, %v2541
      %v2543 = vmul.f32 %v579, %v579
      %v2544 = vmul.f32 %v582, %v582
      %v2545 = vmul.f32 %v587, %v587
      %v2546 = vmul.f32 %v590, %v590
      %v2547 = vmul.f32 %v595, %v595
      %v2548 = vmul.f32 %v598, %v598
      %v2549 = vmul.f32 %v603, %v603
      %v2550 = vmul.f32 %v606, %v606
      %v2551 = vmul.f32 %v611, %v611
      %v2552 = vmul.f32 %v614, %v614
      %v2553 = vmul.f32 %v619, %v619
      %v2554 = vmul.f32 %v622, %v622
      %v2555 = vmul.f32 %v627, %v627
      %v2556 = vmul.f32 %v630, %v630
      %v2557 = vmul.f32 %v635, %v635
      %v2558 = vmul.f32 %v638, %v638
      %v2559 = vmul.f32 %v643, %v643
      %v2560 = vmul.f32 %v646, %v646
      %v2561 = vmul.f32 %v651, %v651
      %v2562 = vmul.f32 %v654, %v654
      %v2563 = vmul.f32 %v659, %v659
      %v2564 = vmul.f32 %v662, %v662
      %v2565 = vmul.f32 %v667, %v667
      %v2566 = vmul.f32 %v670, %v670
      %v2567 = vmul.f32 %v675, %v675
      %v2568 = vmul.f32 %v678, %v678
      %v2569 = vmul.f32 %v683, %v683
      %v2570 = vmul.f32 %v686, %v686
      %v2571 = vmul.f32 %v691, %v691
      %v2572 = vmul.f32 %v694, %v694
      %v2573 = vmul.f32 %v699, %v699
      %v2574 = vmul.f32 %v702, %v702
      %v2575 = vsel %vm495, %v2543, 0.0
      %2576 = vadd.xlane.f32.xlu0 %v2575
      %v2577 = vpop.xlane.xlu0 %2576
      %v2578 = vsel %vm495, %v2544, 0.0
      %2579 = vadd.xlane.f32.xlu0 %v2578
      %v2580 = vpop.xlane.xlu0 %2579
      %v2581 = vsel %vm495, %v2545, 0.0
      %2582 = vadd.xlane.f32.xlu0 %v2581
      %v2583 = vpop.xlane.xlu0 %2582
      %v2584 = vsel %vm495, %v2546, 0.0
      %2585 = vadd.xlane.f32.xlu0 %v2584
      %v2586 = vpop.xlane.xlu0 %2585
      %v2587 = vsel %vm495, %v2547, 0.0
      %2588 = vadd.xlane.f32.xlu0 %v2587
      %v2589 = vpop.xlane.xlu0 %2588
      %v2590 = vsel %vm495, %v2548, 0.0
      %2591 = vadd.xlane.f32.xlu0 %v2590
      %v2592 = vpop.xlane.xlu0 %2591
      %v2593 = vsel %vm495, %v2549, 0.0
      %2594 = vadd.xlane.f32.xlu0 %v2593
      %v2595 = vpop.xlane.xlu0 %2594
      %v2596 = vsel %vm495, %v2550, 0.0
      %2597 = vadd.xlane.f32.xlu0 %v2596
      %v2598 = vpop.xlane.xlu0 %2597
      %v2599 = vsel %vm495, %v2551, 0.0
      %2600 = vadd.xlane.f32.xlu0 %v2599
      %v2601 = vpop.xlane.xlu0 %2600
      %v2602 = vsel %vm495, %v2552, 0.0
      %2603 = vadd.xlane.f32.xlu0 %v2602
      %v2604 = vpop.xlane.xlu0 %2603
      %v2605 = vsel %vm495, %v2553, 0.0
      %2606 = vadd.xlane.f32.xlu0 %v2605
      %v2607 = vpop.xlane.xlu0 %2606
      %v2608 = vsel %vm495, %v2554, 0.0
      %2609 = vadd.xlane.f32.xlu0 %v2608
      %v2610 = vpop.xlane.xlu0 %2609
      %v2611 = vsel %vm495, %v2555, 0.0
      %2612 = vadd.xlane.f32.xlu0 %v2611
      %v2613 = vpop.xlane.xlu0 %2612
      %v2614 = vsel %vm495, %v2556, 0.0
      %2615 = vadd.xlane.f32.xlu0 %v2614
      %v2616 = vpop.xlane.xlu0 %2615
      %v2617 = vsel %vm495, %v2557, 0.0
      %2618 = vadd.xlane.f32.xlu0 %v2617
      %v2619 = vpop.xlane.xlu0 %2618
      %v2620 = vsel %vm495, %v2558, 0.0
      %2621 = vadd.xlane.f32.xlu0 %v2620
      %v2622 = vpop.xlane.xlu0 %2621
      %v2623 = vsel %vm495, %v2559, 0.0
      %2624 = vadd.xlane.f32.xlu0 %v2623
      %v2625 = vpop.xlane.xlu0 %2624
      %v2626 = vsel %vm495, %v2560, 0.0
      %2627 = vadd.xlane.f32.xlu0 %v2626
      %v2628 = vpop.xlane.xlu0 %2627
      %v2629 = vsel %vm495, %v2561, 0.0
      %2630 = vadd.xlane.f32.xlu0 %v2629
      %v2631 = vpop.xlane.xlu0 %2630
      %v2632 = vsel %vm495, %v2562, 0.0
      %2633 = vadd.xlane.f32.xlu0 %v2632
      %v2634 = vpop.xlane.xlu0 %2633
      %v2635 = vsel %vm495, %v2563, 0.0
      %2636 = vadd.xlane.f32.xlu0 %v2635
      %v2637 = vpop.xlane.xlu0 %2636
      %v2638 = vsel %vm495, %v2564, 0.0
      %2639 = vadd.xlane.f32.xlu0 %v2638
      %v2640 = vpop.xlane.xlu0 %2639
      %v2641 = vsel %vm495, %v2565, 0.0
      %2642 = vadd.xlane.f32.xlu0 %v2641
      %v2643 = vpop.xlane.xlu0 %2642
      %v2644 = vsel %vm495, %v2566, 0.0
      %2645 = vadd.xlane.f32.xlu0 %v2644
      %v2646 = vpop.xlane.xlu0 %2645
      %v2647 = vsel %vm495, %v2567, 0.0
      %2648 = vadd.xlane.f32.xlu0 %v2647
      %v2649 = vpop.xlane.xlu0 %2648
      %v2650 = vsel %vm495, %v2568, 0.0
      %2651 = vadd.xlane.f32.xlu0 %v2650
      %v2652 = vpop.xlane.xlu0 %2651
      %v2653 = vsel %vm495, %v2569, 0.0
      %2654 = vadd.xlane.f32.xlu0 %v2653
      %v2655 = vpop.xlane.xlu0 %2654
      %v2656 = vsel %vm495, %v2570, 0.0
      %2657 = vadd.xlane.f32.xlu0 %v2656
      %v2658 = vpop.xlane.xlu0 %2657
      %v2659 = vsel %vm495, %v2571, 0.0
      %2660 = vadd.xlane.f32.xlu0 %v2659
      %v2661 = vpop.xlane.xlu0 %2660
      %v2662 = vsel %vm495, %v2572, 0.0
      %2663 = vadd.xlane.f32.xlu0 %v2662
      %v2664 = vpop.xlane.xlu0 %2663
      %v2665 = vsel %vm495, %v2573, 0.0
      %2666 = vadd.xlane.f32.xlu0 %v2665
      %v2667 = vpop.xlane.xlu0 %2666
      %v2668 = vsel %vm495, %v2574, 0.0
      %2669 = vadd.xlane.f32.xlu0 %v2668
      %v2670 = vpop.xlane.xlu0 %2669
      %v2671 = vsel %vm773, %v2577, 0.0
      %v2672 = vsel %vm774, %v2580, 0.0
      %v2673 = vsel %vm775, %v2583, 0.0
      %v2674 = vsel %vm776, %v2586, 0.0
      %v2675 = vsel %vm777, %v2589, 0.0
      %v2676 = vsel %vm778, %v2592, 0.0
      %v2677 = vsel %vm779, %v2595, 0.0
      %v2678 = vsel %vm780, %v2598, 0.0
      %v2679 = vsel %vm781, %v2601, 0.0
      %v2680 = vsel %vm782, %v2604, 0.0
      %v2681 = vsel %vm783, %v2607, 0.0
      %v2682 = vsel %vm784, %v2610, 0.0
      %v2683 = vsel %vm785, %v2613, 0.0
      %v2684 = vsel %vm786, %v2616, 0.0
      %v2685 = vsel %vm787, %v2619, 0.0
      %v2686 = vsel %vm788, %v2622, 0.0
      %v2687 = vsel %vm789, %v2625, 0.0
      %v2688 = vsel %vm790, %v2628, 0.0
      %v2689 = vsel %vm791, %v2631, 0.0
      %v2690 = vsel %vm792, %v2634, 0.0
      %v2691 = vsel %vm793, %v2637, 0.0
      %v2692 = vsel %vm794, %v2640, 0.0
      %v2693 = vsel %vm795, %v2643, 0.0
      %v2694 = vsel %vm796, %v2646, 0.0
      %v2695 = vsel %vm797, %v2649, 0.0
      %v2696 = vsel %vm798, %v2652, 0.0
      %v2697 = vsel %vm799, %v2655, 0.0
      %v2698 = vsel %vm800, %v2658, 0.0
      %v2699 = vsel %vm801, %v2661, 0.0
      %v2700 = vsel %vm802, %v2664, 0.0
      %v2701 = vsel %vm803, %v2667, 0.0
      %v2702 = vsel %vm804, %v2670, 0.0
      %v2703 = vld [vmem:[%s349] sm:$0x1]
      %v2704 = vsel %vm1222, %v2671, 0.0
      %v2705 = vsel %vm1222, %v2672, 0.0
      %v2706 = vadd.f32 %v2704, %v2705
      %v2707 = vsel %vm1222, %v2673, 0.0
      %v2708 = vadd.f32 %v2706, %v2707
      %v2709 = vsel %vm1222, %v2674, 0.0
      %v2710 = vadd.f32 %v2708, %v2709
      %v2711 = vsel %vm1222, %v2675, 0.0
      %v2712 = vadd.f32 %v2710, %v2711
      %v2713 = vsel %vm1222, %v2676, 0.0
      %v2714 = vadd.f32 %v2712, %v2713
      %v2715 = vsel %vm1222, %v2677, 0.0
      %v2716 = vadd.f32 %v2714, %v2715
      %v2717 = vsel %vm1222, %v2678, 0.0
      %v2718 = vadd.f32 %v2716, %v2717
      %v2719 = vsel %vm1222, %v2679, 0.0
      %v2720 = vadd.f32 %v2718, %v2719
      %v2721 = vsel %vm1222, %v2680, 0.0
      %v2722 = vadd.f32 %v2720, %v2721
      %v2723 = vsel %vm1222, %v2681, 0.0
      %v2724 = vadd.f32 %v2722, %v2723
      %v2725 = vsel %vm1222, %v2682, 0.0
      %v2726 = vadd.f32 %v2724, %v2725
      %v2727 = vsel %vm1222, %v2683, 0.0
      %v2728 = vadd.f32 %v2726, %v2727
      %v2729 = vsel %vm1222, %v2684, 0.0
      %v2730 = vadd.f32 %v2728, %v2729
      %v2731 = vsel %vm1222, %v2685, 0.0
      %v2732 = vadd.f32 %v2730, %v2731
      %v2733 = vsel %vm1222, %v2686, 0.0
      %v2734 = vadd.f32 %v2732, %v2733
      %v2735 = vsel %vm1222, %v2687, 0.0
      %v2736 = vadd.f32 %v2734, %v2735
      %v2737 = vsel %vm1222, %v2688, 0.0
      %v2738 = vadd.f32 %v2736, %v2737
      %v2739 = vsel %vm1222, %v2689, 0.0
      %v2740 = vadd.f32 %v2738, %v2739
      %v2741 = vsel %vm1222, %v2690, 0.0
      %v2742 = vadd.f32 %v2740, %v2741
      %v2743 = vsel %vm1222, %v2691, 0.0
      %v2744 = vadd.f32 %v2742, %v2743
      %v2745 = vsel %vm1222, %v2692, 0.0
      %v2746 = vadd.f32 %v2744, %v2745
      %v2747 = vsel %vm1222, %v2693, 0.0
      %v2748 = vadd.f32 %v2746, %v2747
      %v2749 = vsel %vm1222, %v2694, 0.0
      %v2750 = vadd.f32 %v2748, %v2749
      %v2751 = vsel %vm1222, %v2695, 0.0
      %v2752 = vadd.f32 %v2750, %v2751
      %v2753 = vsel %vm1222, %v2696, 0.0
      %v2754 = vadd.f32 %v2752, %v2753
      %v2755 = vsel %vm1222, %v2697, 0.0
      %v2756 = vadd.f32 %v2754, %v2755
      %v2757 = vsel %vm1222, %v2698, 0.0
      %v2758 = vadd.f32 %v2756, %v2757
      %v2759 = vsel %vm1222, %v2699, 0.0
      %v2760 = vadd.f32 %v2758, %v2759
      %v2761 = vsel %vm1222, %v2700, 0.0
      %v2762 = vadd.f32 %v2760, %v2761
      %v2763 = vsel %vm1222, %v2701, 0.0
      %v2764 = vadd.f32 %v2762, %v2763
      %v2765 = vsel %vm1222, %v2702, 0.0
      %v2766 = vadd.f32 %v2764, %v2765
      %2767 = vadd.xlane.f32.xlu0 %v2766
      %v2768 = vpop.xlane.xlu0 %2767
      %v2769 = vrot.slane %v2768, 4
      %v2770 = vadd.f32 %v2768, %v2769
      %v2771 = vrot.slane %v2770, 2
      %v2772 = vadd.f32 %v2770, %v2771
      %v2773 = vrot.slane %v2772, 1
      %v2774 = vadd.f32 %v2772, %v2773
      %s2775 = vtos %v2774
      %v2776 = vstv %s2775
      %v2777 = vadd.f32 %v2703, %v2776
      %2778 = vst.msk [vmem:[%s349] sm:$0x1] %vm1298, %v2777
      %p2779 = scmp.lt.s32.totalorder %s23, 1
      %s2780 = scalar_select %p2779, %s23, 1
      %s2781 = scalar_lea.vmem %s4, %s2780
      %p2782 = scmp.lt.s32.totalorder %s23, 1
      %s2783 = scalar_select %p2782, %s23, 1
      %s2784 = scalar_lea.vmem %s5, %s2783
      %p2785 = scmp.lt.s32.totalorder %s23, 1
      %s2786 = scalar_select %p2785, %s23, 1
      %s2787 = scalar_lea.vmem %s6, %s2786
      %p2788 = scmp.lt.s32.totalorder %s23, 1
      %s2789 = scalar_select %p2788, %s23, 1
      %s2790 = scalar_lea.vmem %s7, %s2789
      // Predicated region
      $region41: #{tpu_custom_call.1} parent=35 // pred_check
        %p2791 = pneg %p147
      $region42: #{tpu_custom_call.1} parent=35 // pred_check_branch
        %2793 = sbr.rel (%p2791) target = $region44
      $region43: #{tpu_custom_call.1} parent=35 // pred_region
        _
      $region44: #{tpu_custom_call.1} parent=35 // pred_fallthru
        _
      // Predicated region
      $region45: #{tpu_custom_call.1} parent=35 // pred_check
        %p2794 = pneg %p173
      $region46: #{tpu_custom_call.1} parent=35 // pred_check_branch
        %2796 = sbr.rel (%p2794) target = $region48
      $region47: #{tpu_custom_call.1} parent=35 // pred_region
        _
      $region48: #{tpu_custom_call.1} parent=35 // pred_fallthru
        _
      // Predicated region
      $region49: #{tpu_custom_call.1} parent=35 // pred_check
        %p2797 = pneg %p199
      $region50: #{tpu_custom_call.1} parent=35 // pred_check_branch
        %2799 = sbr.rel (%p2797) target = $region52
      $region51: #{tpu_custom_call.1} parent=35 // pred_region
        _
      $region52: #{tpu_custom_call.1} parent=35 // pred_fallthru
        _
      // Predicated region
      $region53: #{tpu_custom_call.1} parent=35 // pred_check
        %p2800 = pneg %p225
      $region54: #{tpu_custom_call.1} parent=35 // pred_check_branch
        %2802 = sbr.rel (%p2800) target = $region56
      $region55: #{tpu_custom_call.1} parent=35 // pred_region
        _
      $region56: #{tpu_custom_call.1} parent=35 // pred_fallthru
        _
    $region36: #{tpu_custom_call.1} parent=5 // pred_fallthru
      _
    %p2803 = scmp.le.s32.totalorder 2, %s14
    // Predicated region
    $region57: #{tpu_custom_call.1} parent=5 // pred_check
      %p2804 = pneg %p2803
    $region58: #{tpu_custom_call.1} parent=5 // pred_check_branch
      %2806 = sbr.rel (%p2804) target = $region60
    $region59: #{tpu_custom_call.1} parent=5 // pred_region
      %s2807 = ssub.s32 %s14, 2
      // Predicated region
      $region61: #{tpu_custom_call.1} parent=59 // pred_check
        %p2808 = pneg %p153
      $region62: #{tpu_custom_call.1} parent=59 // pred_check_branch
        %2810 = sbr.rel (%p2808) target = $region64
      $region63: #{tpu_custom_call.1} parent=59 // pred_region
        %p2811 = scmp.lt.s32.totalorder %s25, 1
        %s2812 = scalar_select %p2811, %s25, 1
        %s2813 = scalar_lea.vmem %s4, %s2812
      $region64: #{tpu_custom_call.1} parent=59 // pred_fallthru
        _
      // Predicated region
      $region65: #{tpu_custom_call.1} parent=59 // pred_check
        %p2814 = pneg %p179
      $region66: #{tpu_custom_call.1} parent=59 // pred_check_branch
        %2816 = sbr.rel (%p2814) target = $region68
      $region67: #{tpu_custom_call.1} parent=59 // pred_region
        %p2817 = scmp.lt.s32.totalorder %s25, 1
        %s2818 = scalar_select %p2817, %s25, 1
        %s2819 = scalar_lea.vmem %s5, %s2818
      $region68: #{tpu_custom_call.1} parent=59 // pred_fallthru
        _
      // Predicated region
      $region69: #{tpu_custom_call.1} parent=59 // pred_check
        %p2820 = pneg %p205
      $region70: #{tpu_custom_call.1} parent=59 // pred_check_branch
        %2822 = sbr.rel (%p2820) target = $region72
      $region71: #{tpu_custom_call.1} parent=59 // pred_region
        %p2823 = scmp.lt.s32.totalorder %s25, 1
        %s2824 = scalar_select %p2823, %s25, 1
        %s2825 = scalar_lea.vmem %s6, %s2824
      $region72: #{tpu_custom_call.1} parent=59 // pred_fallthru
        _
      // Predicated region
      $region73: #{tpu_custom_call.1} parent=59 // pred_check
        %p2826 = pneg %p231
      $region74: #{tpu_custom_call.1} parent=59 // pred_check_branch
        %2828 = sbr.rel (%p2826) target = $region76
      $region75: #{tpu_custom_call.1} parent=59 // pred_region
        %p2829 = scmp.lt.s32.totalorder %s25, 1
        %s2830 = scalar_select %p2829, %s25, 1
        %s2831 = scalar_lea.vmem %s7, %s2830
      $region76: #{tpu_custom_call.1} parent=59 // pred_fallthru
        _
    $region60: #{tpu_custom_call.1} parent=5 // pred_fallthru
      _
  $region6: #{tpu_custom_call.1} parent=0 // loop_footer
    %s18 = sadd.s32 1, %s14
  $region7: #{tpu_custom_call.1} parent=0 // loop_footer_branch
    %13 = sbr.rel target = $region3
  $region8: #{tpu_custom_call.1} parent=0 // loop_exit
    _

</llo_original>
